<compile_context>
chip_gen: v7x
topology: tpu7x:2x2x1
jax: 0.10.0
libtpu: 0.0.40
codegen_flags: <defaults>
</compile_context>

<pallas_src>
import jax
import jax.numpy as jnp
from jax.experimental import pallas as pl
from jax.experimental.pallas import tpu as pltpu


def fusion_kernel(q_ref, im_ref, w1t_ref, b1_ref, w2_ref, b2_ref, out_ref):
    tb = q_ref.shape[0]
    num_classes = w2_ref.shape[0]

    # --- fusion: elementwise product (bf16 on the fast path, f32 on debug path)
    fuse = q_ref[...] * im_ref[...]                          # (TB, FUSE)

    # --- embed_layer (weight_norm pre-folded into w1t): (TB,FUSE)@(FUSE,FC) MXU
    h = jnp.dot(fuse, w1t_ref[...], preferred_element_type=jnp.float32)
    h = jnp.tanh(h + b1_ref[...])                            # (TB, FC) f32

    w2 = w2_ref[...]                                         # (C, FC) f32
    b2 = b2_ref[...]                                         # (1, C)  f32
    col = jax.lax.broadcasted_iota(jnp.int32, (tb, num_classes), 1)

    if num_classes == 2:
        # Closed-form binary log-softmax: one lane reduction, stable softplus.
        wd = w2[1:2, :] - w2[0:1, :]                         # (1, FC)
        bd = b2[0:1, 1:2] - b2[0:1, 0:1]                     # (1, 1)
        d = jnp.sum(h * wd, axis=1, keepdims=True) + bd      # (TB, 1) = l1 - l0
        # softplus(d) = max(d,0) + log(1 + exp(-|d|))   (finite for pad rows too)
        sp = jnp.maximum(d, 0.0) + jnp.log(1.0 + jnp.exp(-jnp.abs(d)))
        # log_softmax = [-softplus(d), -softplus(-d)] ; softplus(-d) = softplus(d) - d
        out = jnp.where(col == 0, -sp, d - sp)               # (TB, 2)
    else:
        # General tiny-C head: VPU multiply + XLU lane reduce per class.
        logits = jnp.zeros((tb, num_classes), jnp.float32)
        for c in range(num_classes):                         # static loop
            lc = jnp.sum(h * w2[c:c + 1, :], axis=1, keepdims=True)
            logits = jnp.where(col == c, lc, logits)
        logits = logits + b2
        m = jnp.max(logits, axis=1, keepdims=True)
        z = logits - m
        out = z - jnp.log(jnp.sum(jnp.exp(z), axis=1, keepdims=True))

    out_ref[...] = out.astype(out_ref.dtype)


def prepare_params(raw, weight_dtype=jnp.bfloat16):
    """Fold torch weight_norm (dim=0): W[o,:] = g[o] * v[o,:] / ||v[o,:]||_2.

    Done once in the wrapper (weights are static per step); the big weight is
    returned pre-transposed as (FUSE, FC) so the kernel feeds the MXU a plain
    (M,K)@(K,N) matmul.  Default dtype is bf16 (fast path); pass jnp.float32
    for the exact debug path.
    """
    s1 = raw["g1"] / jnp.linalg.norm(raw["v1"], axis=1, keepdims=True)   # (FC, 1)
    w1t = (raw["v1"] * s1).T.astype(weight_dtype)                        # (FUSE, FC)
    s2 = raw["g2"] / jnp.linalg.norm(raw["v2"], axis=1, keepdims=True)   # (C, 1)
    w2 = (raw["v2"] * s2).astype(jnp.float32)                            # (C, FC)
    b1 = raw["b1"].reshape(1, -1).astype(jnp.float32)                    # (1, FC)
    b2 = raw["b2"].reshape(1, -1).astype(jnp.float32)                    # (1, C)
    return w1t, w2, b1, b2


def _round_up(x, m):
    return ((x + m - 1) // m) * m


def _pick_block_b(B):
    if B <= 16:
        return B                                 # single tiny step (block == full dim)
    if B <= 1024:
        # >=2 grid steps so v7x's second TensorCore has work; 8-row aligned.
        return min(512, _round_up(pl.cdiv(B, 2), 8))
    return 512                                   # amortizes ~0.35us/step overhead


def fusion_forward(q_feat, im_feat, w1t, w2, b1, b2, block_b=None):
    """Fused FusionModule forward as a single batch-tiled Pallas kernel.

    q_feat / im_feat are cast in the wrapper to the (folded) weight dtype so
    the dominant activation DMA stream matches the MXU operand dtype
    (bf16 by default).
    """
    B, FUSE = q_feat.shape
    FC = w1t.shape[1]
    C = w2.shape[0]
    if block_b is None:
        block_b = _pick_block_b(B)

    compute_dtype = w1t.dtype
    q_feat = q_feat.astype(compute_dtype)
    im_feat = im_feat.astype(compute_dtype)

    grid_spec = pltpu.PrefetchScalarGridSpec(
        num_scalar_prefetch=0,
        grid=(pl.cdiv(B, block_b),),
        in_specs=[
            pl.BlockSpec((block_b, FUSE), lambda i: (i, 0)),   # q   (batch tiled, bf16)
            pl.BlockSpec((block_b, FUSE), lambda i: (i, 0)),   # im  (batch tiled, bf16)
            pl.BlockSpec((FUSE, FC), lambda i: (0, 0)),        # w1t (resident)
            pl.BlockSpec((1, FC), lambda i: (0, 0)),           # b1  (resident)
            pl.BlockSpec((C, FC), lambda i: (0, 0)),           # w2  (resident)
            pl.BlockSpec((1, C), lambda i: (0, 0)),            # b2  (resident)
        ],
        out_specs=pl.BlockSpec((block_b, C), lambda i: (i, 0)),
    )
    # TODO(synk): output is lane-sparse (last dim = 2); a (C, B) lane-dense
    # layout would remove masked vst.msk stores but the absolute bytes are tiny.
    return pl.pallas_call(
        fusion_kernel,
        out_shape=jax.ShapeDtypeStruct((B, C), jnp.float32),
        grid_spec=grid_spec,
        compiler_params=pltpu.CompilerParams(
            dimension_semantics=("parallel",),
            vmem_limit_bytes=32 * 1024 * 1024),
    )(q_feat, im_feat, w1t, b1, w2, b2)


def reference_forward(q_feat, im_feat, raw, compute_dtype=jnp.float32):
    """Plain-JAX reference (mirrors the PyTorch forward; optional bf16 basis)."""
    w1 = raw["v1"] * raw["g1"] / jnp.linalg.norm(raw["v1"], axis=1, keepdims=True)
    w2 = raw["v2"] * raw["g2"] / jnp.linalg.norm(raw["v2"], axis=1, keepdims=True)
    fuse = q_feat.astype(compute_dtype) * im_feat.astype(compute_dtype)
    h = jnp.tanh(
        jnp.dot(fuse, w1.T.astype(compute_dtype),
                preferred_element_type=jnp.float32) + raw["b1"].reshape(1, -1))
    logits = h @ w2.T + raw["b2"].reshape(1, -1)
    return jax.nn.log_softmax(logits, axis=1)


if __name__ == "__main__":
    B, FUSE, FC, C = 8, 1024, 512, 2  # fuse_embed_size=1024, fc_size=512, class_size=2

    key = jax.random.PRNGKey(0)
    kq, ki, kv1, kg1, kb1, kv2, kg2, kb2 = jax.random.split(key, 8)

    # Pre-encoded features (stand-in for q_net / im_net outputs).
    q_feat = jax.random.normal(kq, (B, FUSE), dtype=jnp.float32)
    im_feat = jax.random.normal(ki, (B, FUSE), dtype=jnp.float32)

    raw = {
        "v1": jax.random.normal(kv1, (FC, FUSE), dtype=jnp.float32) * 0.02,
        "g1": jax.random.normal(kg1, (FC, 1), dtype=jnp.float32) * 0.5 + 1.0,
        "b1": jax.random.normal(kb1, (1, FC), dtype=jnp.float32) * 0.01,
        "v2": jax.random.normal(kv2, (C, FC), dtype=jnp.float32) * 0.02,
        "g2": jax.random.normal(kg2, (C, 1), dtype=jnp.float32) * 0.5 + 1.0,
        "b2": jax.random.normal(kb2, (1, C), dtype=jnp.float32) * 0.01,
    }

    # --- default fast path: bf16 activations + weights, f32 accumulation.
    w1t_bf, w2_f, b1_f, b2_f = prepare_params(raw, jnp.bfloat16)
    out_bf16 = jax.block_until_ready(
        fusion_forward(q_feat, im_feat, w1t_bf, w2_f, b1_f, b2_f))
    assert out_bf16.shape == (B, C), out_bf16.shape

    ref_bf16 = jax.block_until_ready(
        reference_forward(q_feat, im_feat, raw, compute_dtype=jnp.bfloat16))
    assert jnp.allclose(out_bf16, ref_bf16, atol=2e-3, rtol=2e-3), (out_bf16, ref_bf16)

    ref_f32 = jax.block_until_ready(reference_forward(q_feat, im_feat, raw))
    assert jnp.allclose(out_bf16, ref_f32, atol=2.5e-2, rtol=2.5e-2), (out_bf16, ref_f32)

    # --- f32 debug path: exact weight_norm semantics.
    w1t_f32, w2_d, b1_d, b2_d = prepare_params(raw, jnp.float32)
    out_f32 = jax.block_until_ready(
        fusion_forward(q_feat, im_feat, w1t_f32, w2_d, b1_d, b2_d))
    assert jnp.allclose(out_f32, ref_f32, atol=1e-3, rtol=1e-3), (out_f32, ref_f32)

    print("KERNEL_OK")
</pallas_src>

<mosaic_0001>
module attributes {stable_mosaic.version = 11 : i64} {
  func.func @fusion_kernel(%arg0: i32, %arg1: memref<8x1024xbf16, #tpu.memory_space<vmem>>, %arg2: memref<8x1024xbf16, #tpu.memory_space<vmem>>, %arg3: memref<1024x512xbf16, #tpu.memory_space<vmem>>, %arg4: memref<1x512xf32, #tpu.memory_space<vmem>>, %arg5: memref<2x512xf32, #tpu.memory_space<vmem>>, %arg6: memref<1x2xf32, #tpu.memory_space<vmem>>, %arg7: memref<8x2xf32, #tpu.memory_space<vmem>>) attributes {dimension_semantics = [#tpu.dimension_semantics<parallel>], iteration_bounds = array<i64: 1>, scalar_prefetch = 0 : i64, scratch_operands = 0 : i64, tpu.core_type = #tpu.core_type<tc>, window_params = [{transform_indices = @transform_0, window_bounds = array<i64: 8, 1024>}, {transform_indices = @transform_1, window_bounds = array<i64: 8, 1024>}, {pipeline_mode = #tpu.pipeline_mode<synchronous>, transform_indices = @transform_2, window_bounds = array<i64: 1024, 512>}, {pipeline_mode = #tpu.pipeline_mode<synchronous>, transform_indices = @transform_3, window_bounds = array<i64: 1, 512>}, {pipeline_mode = #tpu.pipeline_mode<synchronous>, transform_indices = @transform_4, window_bounds = array<i64: 2, 512>}, {pipeline_mode = #tpu.pipeline_mode<synchronous>, transform_indices = @transform_5, window_bounds = array<i64: 1, 2>}, {transform_indices = @transform_6, window_bounds = array<i64: 8, 2>}]} {
    %c0 = arith.constant 0 : index
    %c0_0 = arith.constant 0 : index
    %0 = vector.load %arg1[%c0, %c0_0] : memref<8x1024xbf16, #tpu.memory_space<vmem>>, vector<8x1024xbf16>
    %c0_1 = arith.constant 0 : index
    %c0_2 = arith.constant 0 : index
    %1 = vector.load %arg2[%c0_1, %c0_2] : memref<8x1024xbf16, #tpu.memory_space<vmem>>, vector<8x1024xbf16>
    %2 = arith.mulf %0, %1 : vector<8x1024xbf16>
    %c0_3 = arith.constant 0 : index
    %c0_4 = arith.constant 0 : index
    %3 = vector.load %arg3[%c0_3, %c0_4] : memref<1024x512xbf16, #tpu.memory_space<vmem>>, vector<1024x512xbf16>
    %cst = arith.constant dense<0.000000e+00> : vector<8x512xf32>
    %4 = tpu.matmul %2, %3, %cst {dimension_numbers = #tpu.dot_dimension_numbers<[1], [0], [0], [1], [0, 0, 1, 1], [], []>} : vector<8x1024xbf16>, vector<1024x512xbf16>, vector<8x512xf32> -> vector<8x512xf32>
    %c0_5 = arith.constant 0 : index
    %c0_6 = arith.constant 0 : index
    %5 = vector.load %arg4[%c0_5, %c0_6] : memref<1x512xf32, #tpu.memory_space<vmem>>, vector<1x512xf32>
    %6 = vector.broadcast %5 : vector<1x512xf32> to vector<8x512xf32>
    %7 = arith.addf %4, %6 : vector<8x512xf32>
    %8 = math.tanh %7 : vector<8x512xf32>
    %c0_7 = arith.constant 0 : index
    %c0_8 = arith.constant 0 : index
    %9 = vector.load %arg5[%c0_7, %c0_8] : memref<2x512xf32, #tpu.memory_space<vmem>>, vector<2x512xf32>
    %c0_9 = arith.constant 0 : index
    %c0_10 = arith.constant 0 : index
    %10 = vector.load %arg6[%c0_9, %c0_10] : memref<1x2xf32, #tpu.memory_space<vmem>>, vector<1x2xf32>
    %11 = tpu.iota {dimensions = array<i32: 1>} : vector<8x2xi32>
    %12 = vector.extract_strided_slice %9 {offsets = [1, 0], sizes = [1, 512], strides = [1, 1]} : vector<2x512xf32> to vector<1x512xf32>
    %13 = vector.extract_strided_slice %9 {offsets = [0, 0], sizes = [1, 512], strides = [1, 1]} : vector<2x512xf32> to vector<1x512xf32>
    %14 = arith.subf %12, %13 : vector<1x512xf32>
    %15 = vector.extract_strided_slice %10 {offsets = [0, 1], sizes = [1, 1], strides = [1, 1]} : vector<1x2xf32> to vector<1x1xf32>
    %16 = vector.extract_strided_slice %10 {offsets = [0, 0], sizes = [1, 1], strides = [1, 1]} : vector<1x2xf32> to vector<1x1xf32>
    %17 = arith.subf %15, %16 : vector<1x1xf32>
    %18 = vector.broadcast %14 : vector<1x512xf32> to vector<8x512xf32>
    %19 = arith.mulf %8, %18 : vector<8x512xf32>
    %cst_11 = arith.constant dense<0.000000e+00> : vector<8xf32>
    %20 = vector.multi_reduction <add>, %19, %cst_11 [1] : vector<8x512xf32> to vector<8xf32>
    %21 = vector.shape_cast %20 : vector<8xf32> to vector<8x1xf32>
    %22 = vector.broadcast %17 : vector<1x1xf32> to vector<8x1xf32>
    %23 = arith.addf %21, %22 : vector<8x1xf32>
    %cst_12 = arith.constant 0.000000e+00 : f32
    %24 = vector.broadcast %cst_12 : f32 to vector<8x1xf32>
    %25 = arith.maximumf %23, %24 : vector<8x1xf32>
    %26 = math.absf %23 : vector<8x1xf32>
    %cst_13 = arith.constant 0.000000e+00 : f32
    %27 = vector.broadcast %cst_13 : f32 to vector<8x1xf32>
    %28 = arith.subf %27, %26 : vector<8x1xf32>
    %29 = math.exp %28 : vector<8x1xf32>
    %cst_14 = arith.constant 1.000000e+00 : f32
    %30 = vector.broadcast %cst_14 : f32 to vector<8x1xf32>
    %31 = arith.addf %30, %29 : vector<8x1xf32>
    %32 = math.log %31 : vector<8x1xf32>
    %33 = arith.addf %25, %32 : vector<8x1xf32>
    %c0_i32 = arith.constant 0 : i32
    %34 = vector.broadcast %c0_i32 : i32 to vector<8x2xi32>
    %35 = arith.cmpi eq, %11, %34 : vector<8x2xi32>
    %cst_15 = arith.constant 0.000000e+00 : f32
    %36 = vector.broadcast %cst_15 : f32 to vector<8x1xf32>
    %37 = arith.subf %36, %33 : vector<8x1xf32>
    %38 = arith.subf %23, %33 : vector<8x1xf32>
    %39 = vector.shape_cast %37 : vector<8x1xf32> to vector<8x1xf32>
    %40 = vector.broadcast %39 : vector<8x1xf32> to vector<8x2xf32>
    %41 = vector.shape_cast %38 : vector<8x1xf32> to vector<8x1xf32>
    %42 = vector.broadcast %41 : vector<8x1xf32> to vector<8x2xf32>
    %43 = arith.select %35, %40, %42 : vector<8x2xi1>, vector<8x2xf32>
    %c0_16 = arith.constant 0 : index
    %c0_17 = arith.constant 0 : index
    %44 = vector.load %arg7[%c0_16, %c0_17] : memref<8x2xf32, #tpu.memory_space<vmem>>, vector<8x2xf32>
    tpu.vector_store %arg7[%c0_16, %c0_17], %43 {strides = array<i32>} : memref<8x2xf32, #tpu.memory_space<vmem>>, vector<8x2xf32>,
    return
  }
  func.func @transform_0(%arg0: i32) -> (i32, i32) {
    %c0_i32 = arith.constant 0 : i32
    %c0_i32_0 = arith.constant 0 : i32
    return %arg0, %c0_i32 : i32, i32
  }
  func.func @transform_1(%arg0: i32) -> (i32, i32) {
    %c0_i32 = arith.constant 0 : i32
    %c0_i32_0 = arith.constant 0 : i32
    return %arg0, %c0_i32 : i32, i32
  }
  func.func @transform_2(%arg0: i32) -> (i32, i32) {
    %c0_i32 = arith.constant 0 : i32
    %c0_i32_0 = arith.constant 0 : i32
    %c0_i32_1 = arith.constant 0 : i32
    return %c0_i32, %c0_i32_0 : i32, i32
  }
  func.func @transform_3(%arg0: i32) -> (i32, i32) {
    %c0_i32 = arith.constant 0 : i32
    %c0_i32_0 = arith.constant 0 : i32
    %c0_i32_1 = arith.constant 0 : i32
    return %c0_i32, %c0_i32_0 : i32, i32
  }
  func.func @transform_4(%arg0: i32) -> (i32, i32) {
    %c0_i32 = arith.constant 0 : i32
    %c0_i32_0 = arith.constant 0 : i32
    %c0_i32_1 = arith.constant 0 : i32
    return %c0_i32, %c0_i32_0 : i32, i32
  }
  func.func @transform_5(%arg0: i32) -> (i32, i32) {
    %c0_i32 = arith.constant 0 : i32
    %c0_i32_0 = arith.constant 0 : i32
    %c0_i32_1 = arith.constant 0 : i32
    return %c0_i32, %c0_i32_0 : i32, i32
  }
  func.func @transform_6(%arg0: i32) -> (i32, i32) {
    %c0_i32 = arith.constant 0 : i32
    %c0_i32_0 = arith.constant 0 : i32
    return %arg0, %c0_i32 : i32, i32
  }
}

</mosaic_0001>

<llo_original>
// kernel: tpu_custom_call.1
$region0: #{tpu_custom_call.1}
  #allocation0 [shape = 'u32[]', space=smem, size = 0x4, offset = 0x4, fixed_abs, tag = 'smem constant byte address 0x4 - core index']
  #allocation1 [shape = 'u32[144,128]{1,0:T(1,128)}', space=vmem, size = 0x12000, scoped, tag = 'internal scratch']
  %s0 = inlined_call_operand.hbm [shape: bf16[8,1024], index: 0, kind: input, shape index: {}]
  %s1 = inlined_call_operand.hbm [shape: bf16[8,1024], index: 1, kind: input, shape index: {}]
  %s2 = inlined_call_operand.hbm [shape: bf16[1024,512], index: 2, kind: input, shape index: {}]
  %s3 = inlined_call_operand.vmem [shape: f32[1,512], index: 3, kind: input, shape index: {}]
  %s4 = inlined_call_operand.vmem [shape: f32[2,512], index: 4, kind: input, shape index: {}]
  %s5 = inlined_call_operand.vmem [shape: f32[1,2], index: 5, kind: input, shape index: {}]
  %s6 = inlined_call_operand.vmem [shape: f32[8,2], index: 6, kind: output, shape index: {}]
  %s7 = sld [smem:[#allocation0]]
  $region46: #{tpu_custom_call.1} parent=0
    _
  %s9 = ssub.s32 1, %s7
  %s10 = scalar_select 0, %s9, %s7
  $region1: #{tpu_custom_call.1} parent=0
    #allocation2 [shape = 'u8[16384]{0}', space=vmem, size = 0x4000, scoped, tag = 'input window, operand 0, single buffered']
    #allocation3 [shape = 's32[1]{0}', space=sflag, size = 0x4, scoped, tag = 'scoped memory for tpu_custom_call.1']
    #allocation4 [shape = 'u8[16384]{0}', space=vmem, size = 0x4000, scoped, tag = 'input window, operand 1, single buffered']
    #allocation5 [shape = 's32[1]{0}', space=sflag, size = 0x4, scoped, tag = 'scoped memory for tpu_custom_call.1']
    #allocation6 [shape = 'u8[1048576]{0}', space=vmem, size = 0x100000, scoped, tag = 'input window, operand 2, single buffered']
    %11 = vsyncpa [#allocation3], 0
    %12 = vsyncpa [#allocation5], 0
    // Predicated region
    $region2: #{tpu_custom_call.1} parent=1 // pred_check
      _
    $region3: #{tpu_custom_call.1} parent=1 // pred_check_branch
      %14 = sbr.rel (0) target = $region5
    $region4: #{tpu_custom_call.1} parent=1 // pred_region
      %s16 = ssub.s32 512, 512
      %17 = vsyncadd [#allocation3], %s16
      %s19 = sshll.u32 [#allocation2], 4
      %s20 = int_to_ptr.vmem [resolvable:$true] %s19
      %22 = dma.hbm_to_vmem [thread:$0]  %s0, 512, %s20, [#allocation3]
    $region5: #{tpu_custom_call.1} parent=1 // pred_fallthru
      _
    // Predicated region
    $region6: #{tpu_custom_call.1} parent=1 // pred_check
      _
    $region7: #{tpu_custom_call.1} parent=1 // pred_check_branch
      %24 = sbr.rel (0) target = $region9
    $region8: #{tpu_custom_call.1} parent=1 // pred_region
      %s26 = ssub.s32 512, 512
      %27 = vsyncadd [#allocation5], %s26
      %s29 = sshll.u32 [#allocation4], 4
      %s30 = int_to_ptr.vmem [resolvable:$true] %s29
      %32 = dma.hbm_to_vmem [thread:$0]  %s1, 512, %s30, [#allocation5]
    $region9: #{tpu_custom_call.1} parent=1 // pred_fallthru
      _
    // Predicated region
    $region10: #{tpu_custom_call.1} parent=1 // pred_check
      _
    $region11: #{tpu_custom_call.1} parent=1 // pred_check_branch
      %34 = sbr.rel (0) target = $region13
    $region12: #{tpu_custom_call.1} parent=1 // pred_region
      %s36 = ssub.s32 32768, 32768
      %37 = vsyncadd [#allocation5], %s36
      %s38 = sshll.u32 [#allocation6], 4
      %s39 = int_to_ptr.vmem [resolvable:$true] %s38
      %44 = dma.hbm_to_vmem [thread:$0]  %s2, 32768, %s39, [#allocation5], 256, 256, 16
    $region13: #{tpu_custom_call.1} parent=1 // pred_fallthru
      _
    // Predicated region
    $region14: #{tpu_custom_call.1} parent=1 // pred_check
      _
    $region15: #{tpu_custom_call.1} parent=1 // pred_check_branch
      %46 = sbr.rel (0) target = $region17
    $region16: #{tpu_custom_call.1} parent=1 // pred_region
      _
    $region17: #{tpu_custom_call.1} parent=1 // pred_fallthru
      _
    // Predicated region
    $region18: #{tpu_custom_call.1} parent=1 // pred_check
      _
    $region19: #{tpu_custom_call.1} parent=1 // pred_check_branch
      %48 = sbr.rel (0) target = $region21
    $region20: #{tpu_custom_call.1} parent=1 // pred_region
      _
    $region21: #{tpu_custom_call.1} parent=1 // pred_fallthru
      _
    // Predicated region
    $region22: #{tpu_custom_call.1} parent=1 // pred_check
      _
    $region23: #{tpu_custom_call.1} parent=1 // pred_check_branch
      %50 = sbr.rel (0) target = $region25
    $region24: #{tpu_custom_call.1} parent=1 // pred_region
      _
    $region25: #{tpu_custom_call.1} parent=1 // pred_fallthru
      _
    // Predicated region
    $region26: #{tpu_custom_call.1} parent=1 // pred_check
      _
    $region27: #{tpu_custom_call.1} parent=1 // pred_check_branch
      %52 = sbr.rel (0) target = $region29
    $region28: #{tpu_custom_call.1} parent=1 // pred_region
      %53 = dma.done [#allocation3], 512
    $region29: #{tpu_custom_call.1} parent=1 // pred_fallthru
      _
    // Predicated region
    $region30: #{tpu_custom_call.1} parent=1 // pred_check
      _
    $region31: #{tpu_custom_call.1} parent=1 // pred_check_branch
      %55 = sbr.rel (0) target = $region33
    $region32: #{tpu_custom_call.1} parent=1 // pred_region
      %56 = dma.done [#allocation5], 512
    $region33: #{tpu_custom_call.1} parent=1 // pred_fallthru
      _
    // Predicated region
    $region34: #{tpu_custom_call.1} parent=1 // pred_check
      _
    $region35: #{tpu_custom_call.1} parent=1 // pred_check_branch
      %58 = sbr.rel (0) target = $region37
    $region36: #{tpu_custom_call.1} parent=1 // pred_region
      %59 = dma.done [#allocation5], 32768
    $region37: #{tpu_custom_call.1} parent=1 // pred_fallthru
      _
    %v60 = vld [vmem:[#allocation2] sm:$0xff]
    %v61 = vld [vmem:[#allocation2 + $0x8] sm:$0xff]
    %v62 = vld [vmem:[#allocation2 + $0x10] sm:$0xff]
    %v63 = vld [vmem:[#allocation2 + $0x18] sm:$0xff]
    %v64 = vld [vmem:[#allocation4] sm:$0xff]
    %v65 = vld [vmem:[#allocation4 + $0x8] sm:$0xff]
    %v66 = vld [vmem:[#allocation4 + $0x10] sm:$0xff]
    %v67 = vld [vmem:[#allocation4 + $0x18] sm:$0xff]
    %v68 = vmul.bf16 %v60, %v64
    %v69 = vmul.bf16 %v61, %v65
    %v70 = vmul.bf16 %v62, %v66
    %v71 = vmul.bf16 %v63, %v67
    %v72 = vld [vmem:[#allocation6] sm:$0xff]
    %v73 = vld [vmem:[#allocation6 + $0x8] sm:$0xff]
    %v74 = vld [vmem:[#allocation6 + $0x10] sm:$0xff]
    %v75 = vld [vmem:[#allocation6 + $0x18] sm:$0xff]
    %v76 = vld [vmem:[#allocation6 + $0x20] sm:$0xff]
    %v77 = vld [vmem:[#allocation6 + $0x28] sm:$0xff]
    %v78 = vld [vmem:[#allocation6 + $0x30] sm:$0xff]
    %v79 = vld [vmem:[#allocation6 + $0x38] sm:$0xff]
    %v80 = vld [vmem:[#allocation6 + $0x40] sm:$0xff]
    %v81 = vld [vmem:[#allocation6 + $0x48] sm:$0xff]
    %v82 = vld [vmem:[#allocation6 + $0x50] sm:$0xff]
    %v83 = vld [vmem:[#allocation6 + $0x58] sm:$0xff]
    %v84 = vld [vmem:[#allocation6 + $0x60] sm:$0xff]
    %v85 = vld [vmem:[#allocation6 + $0x68] sm:$0xff]
    %v86 = vld [vmem:[#allocation6 + $0x70] sm:$0xff]
    %v87 = vld [vmem:[#allocation6 + $0x78] sm:$0xff]
    %v88 = vld [vmem:[#allocation6 + $0x80] sm:$0xff]
    %v89 = vld [vmem:[#allocation6 + $0x88] sm:$0xff]
    %v90 = vld [vmem:[#allocation6 + $0x90] sm:$0xff]
    %v91 = vld [vmem:[#allocation6 + $0x98] sm:$0xff]
    %v92 = vld [vmem:[#allocation6 + $0xa0] sm:$0xff]
    %v93 = vld [vmem:[#allocation6 + $0xa8] sm:$0xff]
    %v94 = vld [vmem:[#allocation6 + $0xb0] sm:$0xff]
    %v95 = vld [vmem:[#allocation6 + $0xb8] sm:$0xff]
    %v96 = vld [vmem:[#allocation6 + $0xc0] sm:$0xff]
    %v97 = vld [vmem:[#allocation6 + $0xc8] sm:$0xff]
    %v98 = vld [vmem:[#allocation6 + $0xd0] sm:$0xff]
    %v99 = vld [vmem:[#allocation6 + $0xd8] sm:$0xff]
    %v100 = vld [vmem:[#allocation6 + $0xe0] sm:$0xff]
    %v101 = vld [vmem:[#allocation6 + $0xe8] sm:$0xff]
    %v102 = vld [vmem:[#allocation6 + $0xf0] sm:$0xff]
    %v103 = vld [vmem:[#allocation6 + $0xf8] sm:$0xff]
    %v104 = vld [vmem:[#allocation6 + $0x100] sm:$0xff]
    %v105 = vld [vmem:[#allocation6 + $0x108] sm:$0xff]
    %v106 = vld [vmem:[#allocation6 + $0x110] sm:$0xff]
    %v107 = vld [vmem:[#allocation6 + $0x118] sm:$0xff]
    %v108 = vld [vmem:[#allocation6 + $0x120] sm:$0xff]
    %v109 = vld [vmem:[#allocation6 + $0x128] sm:$0xff]
    %v110 = vld [vmem:[#allocation6 + $0x130] sm:$0xff]
    %v111 = vld [vmem:[#allocation6 + $0x138] sm:$0xff]
    %v112 = vld [vmem:[#allocation6 + $0x140] sm:$0xff]
    %v113 = vld [vmem:[#allocation6 + $0x148] sm:$0xff]
    %v114 = vld [vmem:[#allocation6 + $0x150] sm:$0xff]
    %v115 = vld [vmem:[#allocation6 + $0x158] sm:$0xff]
    %v116 = vld [vmem:[#allocation6 + $0x160] sm:$0xff]
    %v117 = vld [vmem:[#allocation6 + $0x168] sm:$0xff]
    %v118 = vld [vmem:[#allocation6 + $0x170] sm:$0xff]
    %v119 = vld [vmem:[#allocation6 + $0x178] sm:$0xff]
    %v120 = vld [vmem:[#allocation6 + $0x180] sm:$0xff]
    %v121 = vld [vmem:[#allocation6 + $0x188] sm:$0xff]
    %v122 = vld [vmem:[#allocation6 + $0x190] sm:$0xff]
    %v123 = vld [vmem:[#allocation6 + $0x198] sm:$0xff]
    %v124 = vld [vmem:[#allocation6 + $0x1a0] sm:$0xff]
    %v125 = vld [vmem:[#allocation6 + $0x1a8] sm:$0xff]
    %v126 = vld [vmem:[#allocation6 + $0x1b0] sm:$0xff]
    %v127 = vld [vmem:[#allocation6 + $0x1b8] sm:$0xff]
    %v128 = vld [vmem:[#allocation6 + $0x1c0] sm:$0xff]
    %v129 = vld [vmem:[#allocation6 + $0x1c8] sm:$0xff]
    %v130 = vld [vmem:[#allocation6 + $0x1d0] sm:$0xff]
    %v131 = vld [vmem:[#allocation6 + $0x1d8] sm:$0xff]
    %v132 = vld [vmem:[#allocation6 + $0x1e0] sm:$0xff]
    %v133 = vld [vmem:[#allocation6 + $0x1e8] sm:$0xff]
    %v134 = vld [vmem:[#allocation6 + $0x1f0] sm:$0xff]
    %v135 = vld [vmem:[#allocation6 + $0x1f8] sm:$0xff]
    %v136 = vld [vmem:[#allocation6 + $0x200] sm:$0xff]
    %v137 = vld [vmem:[#allocation6 + $0x208] sm:$0xff]
    %v138 = vld [vmem:[#allocation6 + $0x210] sm:$0xff]
    %v139 = vld [vmem:[#allocation6 + $0x218] sm:$0xff]
    %v140 = vld [vmem:[#allocation6 + $0x220] sm:$0xff]
    %v141 = vld [vmem:[#allocation6 + $0x228] sm:$0xff]
    %v142 = vld [vmem:[#allocation6 + $0x230] sm:$0xff]
    %v143 = vld [vmem:[#allocation6 + $0x238] sm:$0xff]
    %v144 = vld [vmem:[#allocation6 + $0x240] sm:$0xff]
    %v145 = vld [vmem:[#allocation6 + $0x248] sm:$0xff]
    %v146 = vld [vmem:[#allocation6 + $0x250] sm:$0xff]
    %v147 = vld [vmem:[#allocation6 + $0x258] sm:$0xff]
    %v148 = vld [vmem:[#allocation6 + $0x260] sm:$0xff]
    %v149 = vld [vmem:[#allocation6 + $0x268] sm:$0xff]
    %v150 = vld [vmem:[#allocation6 + $0x270] sm:$0xff]
    %v151 = vld [vmem:[#allocation6 + $0x278] sm:$0xff]
    %v152 = vld [vmem:[#allocation6 + $0x280] sm:$0xff]
    %v153 = vld [vmem:[#allocation6 + $0x288] sm:$0xff]
    %v154 = vld [vmem:[#allocation6 + $0x290] sm:$0xff]
    %v155 = vld [vmem:[#allocation6 + $0x298] sm:$0xff]
    %v156 = vld [vmem:[#allocation6 + $0x2a0] sm:$0xff]
    %v157 = vld [vmem:[#allocation6 + $0x2a8] sm:$0xff]
    %v158 = vld [vmem:[#allocation6 + $0x2b0] sm:$0xff]
    %v159 = vld [vmem:[#allocation6 + $0x2b8] sm:$0xff]
    %v160 = vld [vmem:[#allocation6 + $0x2c0] sm:$0xff]
    %v161 = vld [vmem:[#allocation6 + $0x2c8] sm:$0xff]
    %v162 = vld [vmem:[#allocation6 + $0x2d0] sm:$0xff]
    %v163 = vld [vmem:[#allocation6 + $0x2d8] sm:$0xff]
    %v164 = vld [vmem:[#allocation6 + $0x2e0] sm:$0xff]
    %v165 = vld [vmem:[#allocation6 + $0x2e8] sm:$0xff]
    %v166 = vld [vmem:[#allocation6 + $0x2f0] sm:$0xff]
    %v167 = vld [vmem:[#allocation6 + $0x2f8] sm:$0xff]
    %v168 = vld [vmem:[#allocation6 + $0x300] sm:$0xff]
    %v169 = vld [vmem:[#allocation6 + $0x308] sm:$0xff]
    %v170 = vld [vmem:[#allocation6 + $0x310] sm:$0xff]
    %v171 = vld [vmem:[#allocation6 + $0x318] sm:$0xff]
    %v172 = vld [vmem:[#allocation6 + $0x320] sm:$0xff]
    %v173 = vld [vmem:[#allocation6 + $0x328] sm:$0xff]
    %v174 = vld [vmem:[#allocation6 + $0x330] sm:$0xff]
    %v175 = vld [vmem:[#allocation6 + $0x338] sm:$0xff]
    %v176 = vld [vmem:[#allocation6 + $0x340] sm:$0xff]
    %v177 = vld [vmem:[#allocation6 + $0x348] sm:$0xff]
    %v178 = vld [vmem:[#allocation6 + $0x350] sm:$0xff]
    %v179 = vld [vmem:[#allocation6 + $0x358] sm:$0xff]
    %v180 = vld [vmem:[#allocation6 + $0x360] sm:$0xff]
    %v181 = vld [vmem:[#allocation6 + $0x368] sm:$0xff]
    %v182 = vld [vmem:[#allocation6 + $0x370] sm:$0xff]
    %v183 = vld [vmem:[#allocation6 + $0x378] sm:$0xff]
    %v184 = vld [vmem:[#allocation6 + $0x380] sm:$0xff]
    %v185 = vld [vmem:[#allocation6 + $0x388] sm:$0xff]
    %v186 = vld [vmem:[#allocation6 + $0x390] sm:$0xff]
    %v187 = vld [vmem:[#allocation6 + $0x398] sm:$0xff]
    %v188 = vld [vmem:[#allocation6 + $0x3a0] sm:$0xff]
    %v189 = vld [vmem:[#allocation6 + $0x3a8] sm:$0xff]
    %v190 = vld [vmem:[#allocation6 + $0x3b0] sm:$0xff]
    %v191 = vld [vmem:[#allocation6 + $0x3b8] sm:$0xff]
    %v192 = vld [vmem:[#allocation6 + $0x3c0] sm:$0xff]
    %v193 = vld [vmem:[#allocation6 + $0x3c8] sm:$0xff]
    %v194 = vld [vmem:[#allocation6 + $0x3d0] sm:$0xff]
    %v195 = vld [vmem:[#allocation6 + $0x3d8] sm:$0xff]
    %v196 = vld [vmem:[#allocation6 + $0x3e0] sm:$0xff]
    %v197 = vld [vmem:[#allocation6 + $0x3e8] sm:$0xff]
    %v198 = vld [vmem:[#allocation6 + $0x3f0] sm:$0xff]
    %v199 = vld [vmem:[#allocation6 + $0x3f8] sm:$0xff]
    %v200 = vld [vmem:[#allocation6 + $0x400] sm:$0xff]
    %v201 = vld [vmem:[#allocation6 + $0x408] sm:$0xff]
    %v202 = vld [vmem:[#allocation6 + $0x410] sm:$0xff]
    %v203 = vld [vmem:[#allocation6 + $0x418] sm:$0xff]
    %v204 = vld [vmem:[#allocation6 + $0x420] sm:$0xff]
    %v205 = vld [vmem:[#allocation6 + $0x428] sm:$0xff]
    %v206 = vld [vmem:[#allocation6 + $0x430] sm:$0xff]
    %v207 = vld [vmem:[#allocation6 + $0x438] sm:$0xff]
    %v208 = vld [vmem:[#allocation6 + $0x440] sm:$0xff]
    %v209 = vld [vmem:[#allocation6 + $0x448] sm:$0xff]
    %v210 = vld [vmem:[#allocation6 + $0x450] sm:$0xff]
    %v211 = vld [vmem:[#allocation6 + $0x458] sm:$0xff]
    %v212 = vld [vmem:[#allocation6 + $0x460] sm:$0xff]
    %v213 = vld [vmem:[#allocation6 + $0x468] sm:$0xff]
    %v214 = vld [vmem:[#allocation6 + $0x470] sm:$0xff]
    %v215 = vld [vmem:[#allocation6 + $0x478] sm:$0xff]
    %v216 = vld [vmem:[#allocation6 + $0x480] sm:$0xff]
    %v217 = vld [vmem:[#allocation6 + $0x488] sm:$0xff]
    %v218 = vld [vmem:[#allocation6 + $0x490] sm:$0xff]
    %v219 = vld [vmem:[#allocation6 + $0x498] sm:$0xff]
    %v220 = vld [vmem:[#allocation6 + $0x4a0] sm:$0xff]
    %v221 = vld [vmem:[#allocation6 + $0x4a8] sm:$0xff]
    %v222 = vld [vmem:[#allocation6 + $0x4b0] sm:$0xff]
    %v223 = vld [vmem:[#allocation6 + $0x4b8] sm:$0xff]
    %v224 = vld [vmem:[#allocation6 + $0x4c0] sm:$0xff]
    %v225 = vld [vmem:[#allocation6 + $0x4c8] sm:$0xff]
    %v226 = vld [vmem:[#allocation6 + $0x4d0] sm:$0xff]
    %v227 = vld [vmem:[#allocation6 + $0x4d8] sm:$0xff]
    %v228 = vld [vmem:[#allocation6 + $0x4e0] sm:$0xff]
    %v229 = vld [vmem:[#allocation6 + $0x4e8] sm:$0xff]
    %v230 = vld [vmem:[#allocation6 + $0x4f0] sm:$0xff]
    %v231 = vld [vmem:[#allocation6 + $0x4f8] sm:$0xff]
    %v232 = vld [vmem:[#allocation6 + $0x500] sm:$0xff]
    %v233 = vld [vmem:[#allocation6 + $0x508] sm:$0xff]
    %v234 = vld [vmem:[#allocation6 + $0x510] sm:$0xff]
    %v235 = vld [vmem:[#allocation6 + $0x518] sm:$0xff]
    %v236 = vld [vmem:[#allocation6 + $0x520] sm:$0xff]
    %v237 = vld [vmem:[#allocation6 + $0x528] sm:$0xff]
    %v238 = vld [vmem:[#allocation6 + $0x530] sm:$0xff]
    %v239 = vld [vmem:[#allocation6 + $0x538] sm:$0xff]
    %v240 = vld [vmem:[#allocation6 + $0x540] sm:$0xff]
    %v241 = vld [vmem:[#allocation6 + $0x548] sm:$0xff]
    %v242 = vld [vmem:[#allocation6 + $0x550] sm:$0xff]
    %v243 = vld [vmem:[#allocation6 + $0x558] sm:$0xff]
    %v244 = vld [vmem:[#allocation6 + $0x560] sm:$0xff]
    %v245 = vld [vmem:[#allocation6 + $0x568] sm:$0xff]
    %v246 = vld [vmem:[#allocation6 + $0x570] sm:$0xff]
    %v247 = vld [vmem:[#allocation6 + $0x578] sm:$0xff]
    %v248 = vld [vmem:[#allocation6 + $0x580] sm:$0xff]
    %v249 = vld [vmem:[#allocation6 + $0x588] sm:$0xff]
    %v250 = vld [vmem:[#allocation6 + $0x590] sm:$0xff]
    %v251 = vld [vmem:[#allocation6 + $0x598] sm:$0xff]
    %v252 = vld [vmem:[#allocation6 + $0x5a0] sm:$0xff]
    %v253 = vld [vmem:[#allocation6 + $0x5a8] sm:$0xff]
    %v254 = vld [vmem:[#allocation6 + $0x5b0] sm:$0xff]
    %v255 = vld [vmem:[#allocation6 + $0x5b8] sm:$0xff]
    %v256 = vld [vmem:[#allocation6 + $0x5c0] sm:$0xff]
    %v257 = vld [vmem:[#allocation6 + $0x5c8] sm:$0xff]
    %v258 = vld [vmem:[#allocation6 + $0x5d0] sm:$0xff]
    %v259 = vld [vmem:[#allocation6 + $0x5d8] sm:$0xff]
    %v260 = vld [vmem:[#allocation6 + $0x5e0] sm:$0xff]
    %v261 = vld [vmem:[#allocation6 + $0x5e8] sm:$0xff]
    %v262 = vld [vmem:[#allocation6 + $0x5f0] sm:$0xff]
    %v263 = vld [vmem:[#allocation6 + $0x5f8] sm:$0xff]
    %v264 = vld [vmem:[#allocation6 + $0x600] sm:$0xff]
    %v265 = vld [vmem:[#allocation6 + $0x608] sm:$0xff]
    %v266 = vld [vmem:[#allocation6 + $0x610] sm:$0xff]
    %v267 = vld [vmem:[#allocation6 + $0x618] sm:$0xff]
    %v268 = vld [vmem:[#allocation6 + $0x620] sm:$0xff]
    %v269 = vld [vmem:[#allocation6 + $0x628] sm:$0xff]
    %v270 = vld [vmem:[#allocation6 + $0x630] sm:$0xff]
    %v271 = vld [vmem:[#allocation6 + $0x638] sm:$0xff]
    %v272 = vld [vmem:[#allocation6 + $0x640] sm:$0xff]
    %v273 = vld [vmem:[#allocation6 + $0x648] sm:$0xff]
    %v274 = vld [vmem:[#allocation6 + $0x650] sm:$0xff]
    %v275 = vld [vmem:[#allocation6 + $0x658] sm:$0xff]
    %v276 = vld [vmem:[#allocation6 + $0x660] sm:$0xff]
    %v277 = vld [vmem:[#allocation6 + $0x668] sm:$0xff]
    %v278 = vld [vmem:[#allocation6 + $0x670] sm:$0xff]
    %v279 = vld [vmem:[#allocation6 + $0x678] sm:$0xff]
    %v280 = vld [vmem:[#allocation6 + $0x680] sm:$0xff]
    %v281 = vld [vmem:[#allocation6 + $0x688] sm:$0xff]
    %v282 = vld [vmem:[#allocation6 + $0x690] sm:$0xff]
    %v283 = vld [vmem:[#allocation6 + $0x698] sm:$0xff]
    %v284 = vld [vmem:[#allocation6 + $0x6a0] sm:$0xff]
    %v285 = vld [vmem:[#allocation6 + $0x6a8] sm:$0xff]
    %v286 = vld [vmem:[#allocation6 + $0x6b0] sm:$0xff]
    %v287 = vld [vmem:[#allocation6 + $0x6b8] sm:$0xff]
    %v288 = vld [vmem:[#allocation6 + $0x6c0] sm:$0xff]
    %v289 = vld [vmem:[#allocation6 + $0x6c8] sm:$0xff]
    %v290 = vld [vmem:[#allocation6 + $0x6d0] sm:$0xff]
    %v291 = vld [vmem:[#allocation6 + $0x6d8] sm:$0xff]
    %v292 = vld [vmem:[#allocation6 + $0x6e0] sm:$0xff]
    %v293 = vld [vmem:[#allocation6 + $0x6e8] sm:$0xff]
    %v294 = vld [vmem:[#allocation6 + $0x6f0] sm:$0xff]
    %v295 = vld [vmem:[#allocation6 + $0x6f8] sm:$0xff]
    %v296 = vld [vmem:[#allocation6 + $0x700] sm:$0xff]
    %v297 = vld [vmem:[#allocation6 + $0x708] sm:$0xff]
    %v298 = vld [vmem:[#allocation6 + $0x710] sm:$0xff]
    %v299 = vld [vmem:[#allocation6 + $0x718] sm:$0xff]
    %v300 = vld [vmem:[#allocation6 + $0x720] sm:$0xff]
    %v301 = vld [vmem:[#allocation6 + $0x728] sm:$0xff]
    %v302 = vld [vmem:[#allocation6 + $0x730] sm:$0xff]
    %v303 = vld [vmem:[#allocation6 + $0x738] sm:$0xff]
    %v304 = vld [vmem:[#allocation6 + $0x740] sm:$0xff]
    %v305 = vld [vmem:[#allocation6 + $0x748] sm:$0xff]
    %v306 = vld [vmem:[#allocation6 + $0x750] sm:$0xff]
    %v307 = vld [vmem:[#allocation6 + $0x758] sm:$0xff]
    %v308 = vld [vmem:[#allocation6 + $0x760] sm:$0xff]
    %v309 = vld [vmem:[#allocation6 + $0x768] sm:$0xff]
    %v310 = vld [vmem:[#allocation6 + $0x770] sm:$0xff]
    %v311 = vld [vmem:[#allocation6 + $0x778] sm:$0xff]
    %v312 = vld [vmem:[#allocation6 + $0x780] sm:$0xff]
    %v313 = vld [vmem:[#allocation6 + $0x788] sm:$0xff]
    %v314 = vld [vmem:[#allocation6 + $0x790] sm:$0xff]
    %v315 = vld [vmem:[#allocation6 + $0x798] sm:$0xff]
    %v316 = vld [vmem:[#allocation6 + $0x7a0] sm:$0xff]
    %v317 = vld [vmem:[#allocation6 + $0x7a8] sm:$0xff]
    %v318 = vld [vmem:[#allocation6 + $0x7b0] sm:$0xff]
    %v319 = vld [vmem:[#allocation6 + $0x7b8] sm:$0xff]
    %v320 = vld [vmem:[#allocation6 + $0x7c0] sm:$0xff]
    %v321 = vld [vmem:[#allocation6 + $0x7c8] sm:$0xff]
    %v322 = vld [vmem:[#allocation6 + $0x7d0] sm:$0xff]
    %v323 = vld [vmem:[#allocation6 + $0x7d8] sm:$0xff]
    %v324 = vld [vmem:[#allocation6 + $0x7e0] sm:$0xff]
    %v325 = vld [vmem:[#allocation6 + $0x7e8] sm:$0xff]
    %v326 = vld [vmem:[#allocation6 + $0x7f0] sm:$0xff]
    %v327 = vld [vmem:[#allocation6 + $0x7f8] sm:$0xff]
    %v328 = vld [vmem:[%s3] sm:$0xf]
    %v330 = vlaneseq
    %v331 = vshrl.u32 %v330, 7
    %v332 = vsub.s32 0, %v331
    %v333 = vrot.slane %v328, %v332
    %v334 = vlaneseq
    %v335 = vshrl.u32 %v334, 7
    %v336 = vsub.s32 1, %v335
    %v337 = vrot.slane %v328, %v336
    %v338 = vlaneseq
    %v339 = vshrl.u32 %v338, 7
    %v340 = vsub.s32 2, %v339
    %v341 = vrot.slane %v328, %v340
    %v342 = vlaneseq
    %v343 = vshrl.u32 %v342, 7
    %v344 = vsub.s32 3, %v343
    %v345 = vrot.slane %v328, %v344
    %v354 = vunpack.c.l.b16 %v68
    %v355 = vunpack.c.h.b16 %v68
    %v356 = vunpack.c.l.b16 %v69
    %v357 = vunpack.c.h.b16 %v69
    %v358 = vunpack.c.l.b16 %v70
    %v359 = vunpack.c.h.b16 %v70
    %v360 = vunpack.c.l.b16 %v71
    %v361 = vunpack.c.h.b16 %v71
    %v362 = vpack.c.b16 %v354, %v354
    %v363 = vpack.c.b16 %v355, %v355
    %v364 = vpack.c.b16 %v356, %v356
    %v365 = vpack.c.b16 %v357, %v357
    %v366 = vpack.c.b16 %v358, %v358
    %v367 = vpack.c.b16 %v359, %v359
    %v368 = vpack.c.b16 %v360, %v360
    %v369 = vpack.c.b16 %v361, %v361
    %v634 = vunpack.c.l.b16 %v72
    %v635 = vunpack.c.h.b16 %v72
    %v636 = vunpack.c.l.b16 %v73
    %v637 = vunpack.c.h.b16 %v73
    %v638 = vunpack.c.l.b16 %v74
    %v639 = vunpack.c.h.b16 %v74
    %v640 = vunpack.c.l.b16 %v75
    %v641 = vunpack.c.h.b16 %v75
    %v642 = vunpack.c.l.b16 %v76
    %v643 = vunpack.c.h.b16 %v76
    %v644 = vunpack.c.l.b16 %v77
    %v645 = vunpack.c.h.b16 %v77
    %v646 = vunpack.c.l.b16 %v78
    %v647 = vunpack.c.h.b16 %v78
    %v648 = vunpack.c.l.b16 %v79
    %v649 = vunpack.c.h.b16 %v79
    %v650 = vunpack.c.l.b16 %v80
    %v651 = vunpack.c.h.b16 %v80
    %v652 = vunpack.c.l.b16 %v81
    %v653 = vunpack.c.h.b16 %v81
    %v654 = vunpack.c.l.b16 %v82
    %v655 = vunpack.c.h.b16 %v82
    %v656 = vunpack.c.l.b16 %v83
    %v657 = vunpack.c.h.b16 %v83
    %v658 = vunpack.c.l.b16 %v84
    %v659 = vunpack.c.h.b16 %v84
    %v660 = vunpack.c.l.b16 %v85
    %v661 = vunpack.c.h.b16 %v85
    %v662 = vunpack.c.l.b16 %v86
    %v663 = vunpack.c.h.b16 %v86
    %v664 = vunpack.c.l.b16 %v87
    %v665 = vunpack.c.h.b16 %v87
    %v666 = vunpack.c.l.b16 %v88
    %v667 = vunpack.c.h.b16 %v88
    %v668 = vunpack.c.l.b16 %v89
    %v669 = vunpack.c.h.b16 %v89
    %v670 = vunpack.c.l.b16 %v90
    %v671 = vunpack.c.h.b16 %v90
    %v672 = vunpack.c.l.b16 %v91
    %v673 = vunpack.c.h.b16 %v91
    %v674 = vunpack.c.l.b16 %v92
    %v675 = vunpack.c.h.b16 %v92
    %v676 = vunpack.c.l.b16 %v93
    %v677 = vunpack.c.h.b16 %v93
    %v678 = vunpack.c.l.b16 %v94
    %v679 = vunpack.c.h.b16 %v94
    %v680 = vunpack.c.l.b16 %v95
    %v681 = vunpack.c.h.b16 %v95
    %v682 = vunpack.c.l.b16 %v96
    %v683 = vunpack.c.h.b16 %v96
    %v684 = vunpack.c.l.b16 %v97
    %v685 = vunpack.c.h.b16 %v97
    %v686 = vunpack.c.l.b16 %v98
    %v687 = vunpack.c.h.b16 %v98
    %v688 = vunpack.c.l.b16 %v99
    %v689 = vunpack.c.h.b16 %v99
    %v690 = vunpack.c.l.b16 %v100
    %v691 = vunpack.c.h.b16 %v100
    %v692 = vunpack.c.l.b16 %v101
    %v693 = vunpack.c.h.b16 %v101
    %v694 = vunpack.c.l.b16 %v102
    %v695 = vunpack.c.h.b16 %v102
    %v696 = vunpack.c.l.b16 %v103
    %v697 = vunpack.c.h.b16 %v103
    %v698 = vunpack.c.l.b16 %v104
    %v699 = vunpack.c.h.b16 %v104
    %v700 = vunpack.c.l.b16 %v105
    %v701 = vunpack.c.h.b16 %v105
    %v702 = vunpack.c.l.b16 %v106
    %v703 = vunpack.c.h.b16 %v106
    %v704 = vunpack.c.l.b16 %v107
    %v705 = vunpack.c.h.b16 %v107
    %v706 = vunpack.c.l.b16 %v108
    %v707 = vunpack.c.h.b16 %v108
    %v708 = vunpack.c.l.b16 %v109
    %v709 = vunpack.c.h.b16 %v109
    %v710 = vunpack.c.l.b16 %v110
    %v711 = vunpack.c.h.b16 %v110
    %v712 = vunpack.c.l.b16 %v111
    %v713 = vunpack.c.h.b16 %v111
    %v714 = vunpack.c.l.b16 %v112
    %v715 = vunpack.c.h.b16 %v112
    %v716 = vunpack.c.l.b16 %v113
    %v717 = vunpack.c.h.b16 %v113
    %v718 = vunpack.c.l.b16 %v114
    %v719 = vunpack.c.h.b16 %v114
    %v720 = vunpack.c.l.b16 %v115
    %v721 = vunpack.c.h.b16 %v115
    %v722 = vunpack.c.l.b16 %v116
    %v723 = vunpack.c.h.b16 %v116
    %v724 = vunpack.c.l.b16 %v117
    %v725 = vunpack.c.h.b16 %v117
    %v726 = vunpack.c.l.b16 %v118
    %v727 = vunpack.c.h.b16 %v118
    %v728 = vunpack.c.l.b16 %v119
    %v729 = vunpack.c.h.b16 %v119
    %v730 = vunpack.c.l.b16 %v120
    %v731 = vunpack.c.h.b16 %v120
    %v732 = vunpack.c.l.b16 %v121
    %v733 = vunpack.c.h.b16 %v121
    %v734 = vunpack.c.l.b16 %v122
    %v735 = vunpack.c.h.b16 %v122
    %v736 = vunpack.c.l.b16 %v123
    %v737 = vunpack.c.h.b16 %v123
    %v738 = vunpack.c.l.b16 %v124
    %v739 = vunpack.c.h.b16 %v124
    %v740 = vunpack.c.l.b16 %v125
    %v741 = vunpack.c.h.b16 %v125
    %v742 = vunpack.c.l.b16 %v126
    %v743 = vunpack.c.h.b16 %v126
    %v744 = vunpack.c.l.b16 %v127
    %v745 = vunpack.c.h.b16 %v127
    %v746 = vunpack.c.l.b16 %v128
    %v747 = vunpack.c.h.b16 %v128
    %v748 = vunpack.c.l.b16 %v129
    %v749 = vunpack.c.h.b16 %v129
    %v750 = vunpack.c.l.b16 %v130
    %v751 = vunpack.c.h.b16 %v130
    %v752 = vunpack.c.l.b16 %v131
    %v753 = vunpack.c.h.b16 %v131
    %v754 = vunpack.c.l.b16 %v132
    %v755 = vunpack.c.h.b16 %v132
    %v756 = vunpack.c.l.b16 %v133
    %v757 = vunpack.c.h.b16 %v133
    %v758 = vunpack.c.l.b16 %v134
    %v759 = vunpack.c.h.b16 %v134
    %v760 = vunpack.c.l.b16 %v135
    %v761 = vunpack.c.h.b16 %v135
    %v762 = vunpack.c.l.b16 %v136
    %v763 = vunpack.c.h.b16 %v136
    %v764 = vunpack.c.l.b16 %v137
    %v765 = vunpack.c.h.b16 %v137
    %v766 = vunpack.c.l.b16 %v138
    %v767 = vunpack.c.h.b16 %v138
    %v768 = vunpack.c.l.b16 %v139
    %v769 = vunpack.c.h.b16 %v139
    %v770 = vunpack.c.l.b16 %v140
    %v771 = vunpack.c.h.b16 %v140
    %v772 = vunpack.c.l.b16 %v141
    %v773 = vunpack.c.h.b16 %v141
    %v774 = vunpack.c.l.b16 %v142
    %v775 = vunpack.c.h.b16 %v142
    %v776 = vunpack.c.l.b16 %v143
    %v777 = vunpack.c.h.b16 %v143
    %v778 = vunpack.c.l.b16 %v144
    %v779 = vunpack.c.h.b16 %v144
    %v780 = vunpack.c.l.b16 %v145
    %v781 = vunpack.c.h.b16 %v145
    %v782 = vunpack.c.l.b16 %v146
    %v783 = vunpack.c.h.b16 %v146
    %v784 = vunpack.c.l.b16 %v147
    %v785 = vunpack.c.h.b16 %v147
    %v786 = vunpack.c.l.b16 %v148
    %v787 = vunpack.c.h.b16 %v148
    %v788 = vunpack.c.l.b16 %v149
    %v789 = vunpack.c.h.b16 %v149
    %v790 = vunpack.c.l.b16 %v150
    %v791 = vunpack.c.h.b16 %v150
    %v792 = vunpack.c.l.b16 %v151
    %v793 = vunpack.c.h.b16 %v151
    %v794 = vunpack.c.l.b16 %v152
    %v795 = vunpack.c.h.b16 %v152
    %v796 = vunpack.c.l.b16 %v153
    %v797 = vunpack.c.h.b16 %v153
    %v798 = vunpack.c.l.b16 %v154
    %v799 = vunpack.c.h.b16 %v154
    %v800 = vunpack.c.l.b16 %v155
    %v801 = vunpack.c.h.b16 %v155
    %v802 = vunpack.c.l.b16 %v156
    %v803 = vunpack.c.h.b16 %v156
    %v804 = vunpack.c.l.b16 %v157
    %v805 = vunpack.c.h.b16 %v157
    %v806 = vunpack.c.l.b16 %v158
    %v807 = vunpack.c.h.b16 %v158
    %v808 = vunpack.c.l.b16 %v159
    %v809 = vunpack.c.h.b16 %v159
    %v810 = vunpack.c.l.b16 %v160
    %v811 = vunpack.c.h.b16 %v160
    %v812 = vunpack.c.l.b16 %v161
    %v813 = vunpack.c.h.b16 %v161
    %v814 = vunpack.c.l.b16 %v162
    %v815 = vunpack.c.h.b16 %v162
    %v816 = vunpack.c.l.b16 %v163
    %v817 = vunpack.c.h.b16 %v163
    %v818 = vunpack.c.l.b16 %v164
    %v819 = vunpack.c.h.b16 %v164
    %v820 = vunpack.c.l.b16 %v165
    %v821 = vunpack.c.h.b16 %v165
    %v822 = vunpack.c.l.b16 %v166
    %v823 = vunpack.c.h.b16 %v166
    %v824 = vunpack.c.l.b16 %v167
    %v825 = vunpack.c.h.b16 %v167
    %v826 = vunpack.c.l.b16 %v168
    %v827 = vunpack.c.h.b16 %v168
    %v828 = vunpack.c.l.b16 %v169
    %v829 = vunpack.c.h.b16 %v169
    %v830 = vunpack.c.l.b16 %v170
    %v831 = vunpack.c.h.b16 %v170
    %v832 = vunpack.c.l.b16 %v171
    %v833 = vunpack.c.h.b16 %v171
    %v834 = vunpack.c.l.b16 %v172
    %v835 = vunpack.c.h.b16 %v172
    %v836 = vunpack.c.l.b16 %v173
    %v837 = vunpack.c.h.b16 %v173
    %v838 = vunpack.c.l.b16 %v174
    %v839 = vunpack.c.h.b16 %v174
    %v840 = vunpack.c.l.b16 %v175
    %v841 = vunpack.c.h.b16 %v175
    %v842 = vunpack.c.l.b16 %v176
    %v843 = vunpack.c.h.b16 %v176
    %v844 = vunpack.c.l.b16 %v177
    %v845 = vunpack.c.h.b16 %v177
    %v846 = vunpack.c.l.b16 %v178
    %v847 = vunpack.c.h.b16 %v178
    %v848 = vunpack.c.l.b16 %v179
    %v849 = vunpack.c.h.b16 %v179
    %v850 = vunpack.c.l.b16 %v180
    %v851 = vunpack.c.h.b16 %v180
    %v852 = vunpack.c.l.b16 %v181
    %v853 = vunpack.c.h.b16 %v181
    %v854 = vunpack.c.l.b16 %v182
    %v855 = vunpack.c.h.b16 %v182
    %v856 = vunpack.c.l.b16 %v183
    %v857 = vunpack.c.h.b16 %v183
    %v858 = vunpack.c.l.b16 %v184
    %v859 = vunpack.c.h.b16 %v184
    %v860 = vunpack.c.l.b16 %v185
    %v861 = vunpack.c.h.b16 %v185
    %v862 = vunpack.c.l.b16 %v186
    %v863 = vunpack.c.h.b16 %v186
    %v864 = vunpack.c.l.b16 %v187
    %v865 = vunpack.c.h.b16 %v187
    %v866 = vunpack.c.l.b16 %v188
    %v867 = vunpack.c.h.b16 %v188
    %v868 = vunpack.c.l.b16 %v189
    %v869 = vunpack.c.h.b16 %v189
    %v870 = vunpack.c.l.b16 %v190
    %v871 = vunpack.c.h.b16 %v190
    %v872 = vunpack.c.l.b16 %v191
    %v873 = vunpack.c.h.b16 %v191
    %v874 = vunpack.c.l.b16 %v192
    %v875 = vunpack.c.h.b16 %v192
    %v876 = vunpack.c.l.b16 %v193
    %v877 = vunpack.c.h.b16 %v193
    %v878 = vunpack.c.l.b16 %v194
    %v879 = vunpack.c.h.b16 %v194
    %v880 = vunpack.c.l.b16 %v195
    %v881 = vunpack.c.h.b16 %v195
    %v882 = vunpack.c.l.b16 %v196
    %v883 = vunpack.c.h.b16 %v196
    %v884 = vunpack.c.l.b16 %v197
    %v885 = vunpack.c.h.b16 %v197
    %v886 = vunpack.c.l.b16 %v198
    %v887 = vunpack.c.h.b16 %v198
    %v888 = vunpack.c.l.b16 %v199
    %v889 = vunpack.c.h.b16 %v199
    %v890 = vunpack.c.l.b16 %v200
    %v891 = vunpack.c.h.b16 %v200
    %v892 = vunpack.c.l.b16 %v201
    %v893 = vunpack.c.h.b16 %v201
    %v894 = vunpack.c.l.b16 %v202
    %v895 = vunpack.c.h.b16 %v202
    %v896 = vunpack.c.l.b16 %v203
    %v897 = vunpack.c.h.b16 %v203
    %v898 = vunpack.c.l.b16 %v204
    %v899 = vunpack.c.h.b16 %v204
    %v900 = vunpack.c.l.b16 %v205
    %v901 = vunpack.c.h.b16 %v205
    %v902 = vunpack.c.l.b16 %v206
    %v903 = vunpack.c.h.b16 %v206
    %v904 = vunpack.c.l.b16 %v207
    %v905 = vunpack.c.h.b16 %v207
    %v906 = vunpack.c.l.b16 %v208
    %v907 = vunpack.c.h.b16 %v208
    %v908 = vunpack.c.l.b16 %v209
    %v909 = vunpack.c.h.b16 %v209
    %v910 = vunpack.c.l.b16 %v210
    %v911 = vunpack.c.h.b16 %v210
    %v912 = vunpack.c.l.b16 %v211
    %v913 = vunpack.c.h.b16 %v211
    %v914 = vunpack.c.l.b16 %v212
    %v915 = vunpack.c.h.b16 %v212
    %v916 = vunpack.c.l.b16 %v213
    %v917 = vunpack.c.h.b16 %v213
    %v918 = vunpack.c.l.b16 %v214
    %v919 = vunpack.c.h.b16 %v214
    %v920 = vunpack.c.l.b16 %v215
    %v921 = vunpack.c.h.b16 %v215
    %v922 = vunpack.c.l.b16 %v216
    %v923 = vunpack.c.h.b16 %v216
    %v924 = vunpack.c.l.b16 %v217
    %v925 = vunpack.c.h.b16 %v217
    %v926 = vunpack.c.l.b16 %v218
    %v927 = vunpack.c.h.b16 %v218
    %v928 = vunpack.c.l.b16 %v219
    %v929 = vunpack.c.h.b16 %v219
    %v930 = vunpack.c.l.b16 %v220
    %v931 = vunpack.c.h.b16 %v220
    %v932 = vunpack.c.l.b16 %v221
    %v933 = vunpack.c.h.b16 %v221
    %v934 = vunpack.c.l.b16 %v222
    %v935 = vunpack.c.h.b16 %v222
    %v936 = vunpack.c.l.b16 %v223
    %v937 = vunpack.c.h.b16 %v223
    %v938 = vunpack.c.l.b16 %v224
    %v939 = vunpack.c.h.b16 %v224
    %v940 = vunpack.c.l.b16 %v225
    %v941 = vunpack.c.h.b16 %v225
    %v942 = vunpack.c.l.b16 %v226
    %v943 = vunpack.c.h.b16 %v226
    %v944 = vunpack.c.l.b16 %v227
    %v945 = vunpack.c.h.b16 %v227
    %v946 = vunpack.c.l.b16 %v228
    %v947 = vunpack.c.h.b16 %v228
    %v948 = vunpack.c.l.b16 %v229
    %v949 = vunpack.c.h.b16 %v229
    %v950 = vunpack.c.l.b16 %v230
    %v951 = vunpack.c.h.b16 %v230
    %v952 = vunpack.c.l.b16 %v231
    %v953 = vunpack.c.h.b16 %v231
    %v954 = vunpack.c.l.b16 %v232
    %v955 = vunpack.c.h.b16 %v232
    %v956 = vunpack.c.l.b16 %v233
    %v957 = vunpack.c.h.b16 %v233
    %v958 = vunpack.c.l.b16 %v234
    %v959 = vunpack.c.h.b16 %v234
    %v960 = vunpack.c.l.b16 %v235
    %v961 = vunpack.c.h.b16 %v235
    %v962 = vunpack.c.l.b16 %v236
    %v963 = vunpack.c.h.b16 %v236
    %v964 = vunpack.c.l.b16 %v237
    %v965 = vunpack.c.h.b16 %v237
    %v966 = vunpack.c.l.b16 %v238
    %v967 = vunpack.c.h.b16 %v238
    %v968 = vunpack.c.l.b16 %v239
    %v969 = vunpack.c.h.b16 %v239
    %v970 = vunpack.c.l.b16 %v240
    %v971 = vunpack.c.h.b16 %v240
    %v972 = vunpack.c.l.b16 %v241
    %v973 = vunpack.c.h.b16 %v241
    %v974 = vunpack.c.l.b16 %v242
    %v975 = vunpack.c.h.b16 %v242
    %v976 = vunpack.c.l.b16 %v243
    %v977 = vunpack.c.h.b16 %v243
    %v978 = vunpack.c.l.b16 %v244
    %v979 = vunpack.c.h.b16 %v244
    %v980 = vunpack.c.l.b16 %v245
    %v981 = vunpack.c.h.b16 %v245
    %v982 = vunpack.c.l.b16 %v246
    %v983 = vunpack.c.h.b16 %v246
    %v984 = vunpack.c.l.b16 %v247
    %v985 = vunpack.c.h.b16 %v247
    %v986 = vunpack.c.l.b16 %v248
    %v987 = vunpack.c.h.b16 %v248
    %v988 = vunpack.c.l.b16 %v249
    %v989 = vunpack.c.h.b16 %v249
    %v990 = vunpack.c.l.b16 %v250
    %v991 = vunpack.c.h.b16 %v250
    %v992 = vunpack.c.l.b16 %v251
    %v993 = vunpack.c.h.b16 %v251
    %v994 = vunpack.c.l.b16 %v252
    %v995 = vunpack.c.h.b16 %v252
    %v996 = vunpack.c.l.b16 %v253
    %v997 = vunpack.c.h.b16 %v253
    %v998 = vunpack.c.l.b16 %v254
    %v999 = vunpack.c.h.b16 %v254
    %v1000 = vunpack.c.l.b16 %v255
    %v1001 = vunpack.c.h.b16 %v255
    %v1002 = vunpack.c.l.b16 %v256
    %v1003 = vunpack.c.h.b16 %v256
    %v1004 = vunpack.c.l.b16 %v257
    %v1005 = vunpack.c.h.b16 %v257
    %v1006 = vunpack.c.l.b16 %v258
    %v1007 = vunpack.c.h.b16 %v258
    %v1008 = vunpack.c.l.b16 %v259
    %v1009 = vunpack.c.h.b16 %v259
    %v1010 = vunpack.c.l.b16 %v260
    %v1011 = vunpack.c.h.b16 %v260
    %v1012 = vunpack.c.l.b16 %v261
    %v1013 = vunpack.c.h.b16 %v261
    %v1014 = vunpack.c.l.b16 %v262
    %v1015 = vunpack.c.h.b16 %v262
    %v1016 = vunpack.c.l.b16 %v263
    %v1017 = vunpack.c.h.b16 %v263
    %v1018 = vunpack.c.l.b16 %v264
    %v1019 = vunpack.c.h.b16 %v264
    %v1020 = vunpack.c.l.b16 %v265
    %v1021 = vunpack.c.h.b16 %v265
    %v1022 = vunpack.c.l.b16 %v266
    %v1023 = vunpack.c.h.b16 %v266
    %v1024 = vunpack.c.l.b16 %v267
    %v1025 = vunpack.c.h.b16 %v267
    %v1026 = vunpack.c.l.b16 %v268
    %v1027 = vunpack.c.h.b16 %v268
    %v1028 = vunpack.c.l.b16 %v269
    %v1029 = vunpack.c.h.b16 %v269
    %v1030 = vunpack.c.l.b16 %v270
    %v1031 = vunpack.c.h.b16 %v270
    %v1032 = vunpack.c.l.b16 %v271
    %v1033 = vunpack.c.h.b16 %v271
    %v1034 = vunpack.c.l.b16 %v272
    %v1035 = vunpack.c.h.b16 %v272
    %v1036 = vunpack.c.l.b16 %v273
    %v1037 = vunpack.c.h.b16 %v273
    %v1038 = vunpack.c.l.b16 %v274
    %v1039 = vunpack.c.h.b16 %v274
    %v1040 = vunpack.c.l.b16 %v275
    %v1041 = vunpack.c.h.b16 %v275
    %v1042 = vunpack.c.l.b16 %v276
    %v1043 = vunpack.c.h.b16 %v276
    %v1044 = vunpack.c.l.b16 %v277
    %v1045 = vunpack.c.h.b16 %v277
    %v1046 = vunpack.c.l.b16 %v278
    %v1047 = vunpack.c.h.b16 %v278
    %v1048 = vunpack.c.l.b16 %v279
    %v1049 = vunpack.c.h.b16 %v279
    %v1050 = vunpack.c.l.b16 %v280
    %v1051 = vunpack.c.h.b16 %v280
    %v1052 = vunpack.c.l.b16 %v281
    %v1053 = vunpack.c.h.b16 %v281
    %v1054 = vunpack.c.l.b16 %v282
    %v1055 = vunpack.c.h.b16 %v282
    %v1056 = vunpack.c.l.b16 %v283
    %v1057 = vunpack.c.h.b16 %v283
    %v1058 = vunpack.c.l.b16 %v284
    %v1059 = vunpack.c.h.b16 %v284
    %v1060 = vunpack.c.l.b16 %v285
    %v1061 = vunpack.c.h.b16 %v285
    %v1062 = vunpack.c.l.b16 %v286
    %v1063 = vunpack.c.h.b16 %v286
    %v1064 = vunpack.c.l.b16 %v287
    %v1065 = vunpack.c.h.b16 %v287
    %v1066 = vunpack.c.l.b16 %v288
    %v1067 = vunpack.c.h.b16 %v288
    %v1068 = vunpack.c.l.b16 %v289
    %v1069 = vunpack.c.h.b16 %v289
    %v1070 = vunpack.c.l.b16 %v290
    %v1071 = vunpack.c.h.b16 %v290
    %v1072 = vunpack.c.l.b16 %v291
    %v1073 = vunpack.c.h.b16 %v291
    %v1074 = vunpack.c.l.b16 %v292
    %v1075 = vunpack.c.h.b16 %v292
    %v1076 = vunpack.c.l.b16 %v293
    %v1077 = vunpack.c.h.b16 %v293
    %v1078 = vunpack.c.l.b16 %v294
    %v1079 = vunpack.c.h.b16 %v294
    %v1080 = vunpack.c.l.b16 %v295
    %v1081 = vunpack.c.h.b16 %v295
    %v1082 = vunpack.c.l.b16 %v296
    %v1083 = vunpack.c.h.b16 %v296
    %v1084 = vunpack.c.l.b16 %v297
    %v1085 = vunpack.c.h.b16 %v297
    %v1086 = vunpack.c.l.b16 %v298
    %v1087 = vunpack.c.h.b16 %v298
    %v1088 = vunpack.c.l.b16 %v299
    %v1089 = vunpack.c.h.b16 %v299
    %v1090 = vunpack.c.l.b16 %v300
    %v1091 = vunpack.c.h.b16 %v300
    %v1092 = vunpack.c.l.b16 %v301
    %v1093 = vunpack.c.h.b16 %v301
    %v1094 = vunpack.c.l.b16 %v302
    %v1095 = vunpack.c.h.b16 %v302
    %v1096 = vunpack.c.l.b16 %v303
    %v1097 = vunpack.c.h.b16 %v303
    %v1098 = vunpack.c.l.b16 %v304
    %v1099 = vunpack.c.h.b16 %v304
    %v1100 = vunpack.c.l.b16 %v305
    %v1101 = vunpack.c.h.b16 %v305
    %v1102 = vunpack.c.l.b16 %v306
    %v1103 = vunpack.c.h.b16 %v306
    %v1104 = vunpack.c.l.b16 %v307
    %v1105 = vunpack.c.h.b16 %v307
    %v1106 = vunpack.c.l.b16 %v308
    %v1107 = vunpack.c.h.b16 %v308
    %v1108 = vunpack.c.l.b16 %v309
    %v1109 = vunpack.c.h.b16 %v309
    %v1110 = vunpack.c.l.b16 %v310
    %v1111 = vunpack.c.h.b16 %v310
    %v1112 = vunpack.c.l.b16 %v311
    %v1113 = vunpack.c.h.b16 %v311
    %v1114 = vunpack.c.l.b16 %v312
    %v1115 = vunpack.c.h.b16 %v312
    %v1116 = vunpack.c.l.b16 %v313
    %v1117 = vunpack.c.h.b16 %v313
    %v1118 = vunpack.c.l.b16 %v314
    %v1119 = vunpack.c.h.b16 %v314
    %v1120 = vunpack.c.l.b16 %v315
    %v1121 = vunpack.c.h.b16 %v315
    %v1122 = vunpack.c.l.b16 %v316
    %v1123 = vunpack.c.h.b16 %v316
    %v1124 = vunpack.c.l.b16 %v317
    %v1125 = vunpack.c.h.b16 %v317
    %v1126 = vunpack.c.l.b16 %v318
    %v1127 = vunpack.c.h.b16 %v318
    %v1128 = vunpack.c.l.b16 %v319
    %v1129 = vunpack.c.h.b16 %v319
    %v1130 = vunpack.c.l.b16 %v320
    %v1131 = vunpack.c.h.b16 %v320
    %v1132 = vunpack.c.l.b16 %v321
    %v1133 = vunpack.c.h.b16 %v321
    %v1134 = vunpack.c.l.b16 %v322
    %v1135 = vunpack.c.h.b16 %v322
    %v1136 = vunpack.c.l.b16 %v323
    %v1137 = vunpack.c.h.b16 %v323
    %v1138 = vunpack.c.l.b16 %v324
    %v1139 = vunpack.c.h.b16 %v324
    %v1140 = vunpack.c.l.b16 %v325
    %v1141 = vunpack.c.h.b16 %v325
    %v1142 = vunpack.c.l.b16 %v326
    %v1143 = vunpack.c.h.b16 %v326
    %v1144 = vunpack.c.l.b16 %v327
    %v1145 = vunpack.c.h.b16 %v327
    %v1146 = vpack.c.b16 %v638, %v634
    %v1147 = vpack.c.b16 %v639, %v635
    %v1148 = vpack.c.b16 %v640, %v636
    %v1149 = vpack.c.b16 %v641, %v637
    %v1150 = vpack.c.b16 %v646, %v642
    %v1151 = vpack.c.b16 %v647, %v643
    %v1152 = vpack.c.b16 %v648, %v644
    %v1153 = vpack.c.b16 %v649, %v645
    %v1154 = vpack.c.b16 %v654, %v650
    %v1155 = vpack.c.b16 %v655, %v651
    %v1156 = vpack.c.b16 %v656, %v652
    %v1157 = vpack.c.b16 %v657, %v653
    %v1158 = vpack.c.b16 %v662, %v658
    %v1159 = vpack.c.b16 %v663, %v659
    %v1160 = vpack.c.b16 %v664, %v660
    %v1161 = vpack.c.b16 %v665, %v661
    %v1162 = vpack.c.b16 %v670, %v666
    %v1163 = vpack.c.b16 %v671, %v667
    %v1164 = vpack.c.b16 %v672, %v668
    %v1165 = vpack.c.b16 %v673, %v669
    %v1166 = vpack.c.b16 %v678, %v674
    %v1167 = vpack.c.b16 %v679, %v675
    %v1168 = vpack.c.b16 %v680, %v676
    %v1169 = vpack.c.b16 %v681, %v677
    %v1170 = vpack.c.b16 %v686, %v682
    %v1171 = vpack.c.b16 %v687, %v683
    %v1172 = vpack.c.b16 %v688, %v684
    %v1173 = vpack.c.b16 %v689, %v685
    %v1174 = vpack.c.b16 %v694, %v690
    %v1175 = vpack.c.b16 %v695, %v691
    %v1176 = vpack.c.b16 %v696, %v692
    %v1177 = vpack.c.b16 %v697, %v693
    %v1178 = vpack.c.b16 %v702, %v698
    %v1179 = vpack.c.b16 %v703, %v699
    %v1180 = vpack.c.b16 %v704, %v700
    %v1181 = vpack.c.b16 %v705, %v701
    %v1182 = vpack.c.b16 %v710, %v706
    %v1183 = vpack.c.b16 %v711, %v707
    %v1184 = vpack.c.b16 %v712, %v708
    %v1185 = vpack.c.b16 %v713, %v709
    %v1186 = vpack.c.b16 %v718, %v714
    %v1187 = vpack.c.b16 %v719, %v715
    %v1188 = vpack.c.b16 %v720, %v716
    %v1189 = vpack.c.b16 %v721, %v717
    %v1190 = vpack.c.b16 %v726, %v722
    %v1191 = vpack.c.b16 %v727, %v723
    %v1192 = vpack.c.b16 %v728, %v724
    %v1193 = vpack.c.b16 %v729, %v725
    %v1194 = vpack.c.b16 %v734, %v730
    %v1195 = vpack.c.b16 %v735, %v731
    %v1196 = vpack.c.b16 %v736, %v732
    %v1197 = vpack.c.b16 %v737, %v733
    %v1198 = vpack.c.b16 %v742, %v738
    %v1199 = vpack.c.b16 %v743, %v739
    %v1200 = vpack.c.b16 %v744, %v740
    %v1201 = vpack.c.b16 %v745, %v741
    %v1202 = vpack.c.b16 %v750, %v746
    %v1203 = vpack.c.b16 %v751, %v747
    %v1204 = vpack.c.b16 %v752, %v748
    %v1205 = vpack.c.b16 %v753, %v749
    %v1206 = vpack.c.b16 %v758, %v754
    %v1207 = vpack.c.b16 %v759, %v755
    %v1208 = vpack.c.b16 %v760, %v756
    %v1209 = vpack.c.b16 %v761, %v757
    %v1210 = vpack.c.b16 %v766, %v762
    %v1211 = vpack.c.b16 %v767, %v763
    %v1212 = vpack.c.b16 %v768, %v764
    %v1213 = vpack.c.b16 %v769, %v765
    %v1214 = vpack.c.b16 %v774, %v770
    %v1215 = vpack.c.b16 %v775, %v771
    %v1216 = vpack.c.b16 %v776, %v772
    %v1217 = vpack.c.b16 %v777, %v773
    %v1218 = vpack.c.b16 %v782, %v778
    %v1219 = vpack.c.b16 %v783, %v779
    %v1220 = vpack.c.b16 %v784, %v780
    %v1221 = vpack.c.b16 %v785, %v781
    %v1222 = vpack.c.b16 %v790, %v786
    %v1223 = vpack.c.b16 %v791, %v787
    %v1224 = vpack.c.b16 %v792, %v788
    %v1225 = vpack.c.b16 %v793, %v789
    %v1226 = vpack.c.b16 %v798, %v794
    %v1227 = vpack.c.b16 %v799, %v795
    %v1228 = vpack.c.b16 %v800, %v796
    %v1229 = vpack.c.b16 %v801, %v797
    %v1230 = vpack.c.b16 %v806, %v802
    %v1231 = vpack.c.b16 %v807, %v803
    %v1232 = vpack.c.b16 %v808, %v804
    %v1233 = vpack.c.b16 %v809, %v805
    %v1234 = vpack.c.b16 %v814, %v810
    %v1235 = vpack.c.b16 %v815, %v811
    %v1236 = vpack.c.b16 %v816, %v812
    %v1237 = vpack.c.b16 %v817, %v813
    %v1238 = vpack.c.b16 %v822, %v818
    %v1239 = vpack.c.b16 %v823, %v819
    %v1240 = vpack.c.b16 %v824, %v820
    %v1241 = vpack.c.b16 %v825, %v821
    %v1242 = vpack.c.b16 %v830, %v826
    %v1243 = vpack.c.b16 %v831, %v827
    %v1244 = vpack.c.b16 %v832, %v828
    %v1245 = vpack.c.b16 %v833, %v829
    %v1246 = vpack.c.b16 %v838, %v834
    %v1247 = vpack.c.b16 %v839, %v835
    %v1248 = vpack.c.b16 %v840, %v836
    %v1249 = vpack.c.b16 %v841, %v837
    %v1250 = vpack.c.b16 %v846, %v842
    %v1251 = vpack.c.b16 %v847, %v843
    %v1252 = vpack.c.b16 %v848, %v844
    %v1253 = vpack.c.b16 %v849, %v845
    %v1254 = vpack.c.b16 %v854, %v850
    %v1255 = vpack.c.b16 %v855, %v851
    %v1256 = vpack.c.b16 %v856, %v852
    %v1257 = vpack.c.b16 %v857, %v853
    %v1258 = vpack.c.b16 %v862, %v858
    %v1259 = vpack.c.b16 %v863, %v859
    %v1260 = vpack.c.b16 %v864, %v860
    %v1261 = vpack.c.b16 %v865, %v861
    %v1262 = vpack.c.b16 %v870, %v866
    %v1263 = vpack.c.b16 %v871, %v867
    %v1264 = vpack.c.b16 %v872, %v868
    %v1265 = vpack.c.b16 %v873, %v869
    %v1266 = vpack.c.b16 %v878, %v874
    %v1267 = vpack.c.b16 %v879, %v875
    %v1268 = vpack.c.b16 %v880, %v876
    %v1269 = vpack.c.b16 %v881, %v877
    %v1270 = vpack.c.b16 %v886, %v882
    %v1271 = vpack.c.b16 %v887, %v883
    %v1272 = vpack.c.b16 %v888, %v884
    %v1273 = vpack.c.b16 %v889, %v885
    %v1274 = vpack.c.b16 %v894, %v890
    %v1275 = vpack.c.b16 %v895, %v891
    %v1276 = vpack.c.b16 %v896, %v892
    %v1277 = vpack.c.b16 %v897, %v893
    %v1278 = vpack.c.b16 %v902, %v898
    %v1279 = vpack.c.b16 %v903, %v899
    %v1280 = vpack.c.b16 %v904, %v900
    %v1281 = vpack.c.b16 %v905, %v901
    %v1282 = vpack.c.b16 %v910, %v906
    %v1283 = vpack.c.b16 %v911, %v907
    %v1284 = vpack.c.b16 %v912, %v908
    %v1285 = vpack.c.b16 %v913, %v909
    %v1286 = vpack.c.b16 %v918, %v914
    %v1287 = vpack.c.b16 %v919, %v915
    %v1288 = vpack.c.b16 %v920, %v916
    %v1289 = vpack.c.b16 %v921, %v917
    %v1290 = vpack.c.b16 %v926, %v922
    %v1291 = vpack.c.b16 %v927, %v923
    %v1292 = vpack.c.b16 %v928, %v924
    %v1293 = vpack.c.b16 %v929, %v925
    %v1294 = vpack.c.b16 %v934, %v930
    %v1295 = vpack.c.b16 %v935, %v931
    %v1296 = vpack.c.b16 %v936, %v932
    %v1297 = vpack.c.b16 %v937, %v933
    %v1298 = vpack.c.b16 %v942, %v938
    %v1299 = vpack.c.b16 %v943, %v939
    %v1300 = vpack.c.b16 %v944, %v940
    %v1301 = vpack.c.b16 %v945, %v941
    %v1302 = vpack.c.b16 %v950, %v946
    %v1303 = vpack.c.b16 %v951, %v947
    %v1304 = vpack.c.b16 %v952, %v948
    %v1305 = vpack.c.b16 %v953, %v949
    %v1306 = vpack.c.b16 %v958, %v954
    %v1307 = vpack.c.b16 %v959, %v955
    %v1308 = vpack.c.b16 %v960, %v956
    %v1309 = vpack.c.b16 %v961, %v957
    %v1310 = vpack.c.b16 %v966, %v962
    %v1311 = vpack.c.b16 %v967, %v963
    %v1312 = vpack.c.b16 %v968, %v964
    %v1313 = vpack.c.b16 %v969, %v965
    %v1314 = vpack.c.b16 %v974, %v970
    %v1315 = vpack.c.b16 %v975, %v971
    %v1316 = vpack.c.b16 %v976, %v972
    %v1317 = vpack.c.b16 %v977, %v973
    %v1318 = vpack.c.b16 %v982, %v978
    %v1319 = vpack.c.b16 %v983, %v979
    %v1320 = vpack.c.b16 %v984, %v980
    %v1321 = vpack.c.b16 %v985, %v981
    %v1322 = vpack.c.b16 %v990, %v986
    %v1323 = vpack.c.b16 %v991, %v987
    %v1324 = vpack.c.b16 %v992, %v988
    %v1325 = vpack.c.b16 %v993, %v989
    %v1326 = vpack.c.b16 %v998, %v994
    %v1327 = vpack.c.b16 %v999, %v995
    %v1328 = vpack.c.b16 %v1000, %v996
    %v1329 = vpack.c.b16 %v1001, %v997
    %v1330 = vpack.c.b16 %v1006, %v1002
    %v1331 = vpack.c.b16 %v1007, %v1003
    %v1332 = vpack.c.b16 %v1008, %v1004
    %v1333 = vpack.c.b16 %v1009, %v1005
    %v1334 = vpack.c.b16 %v1014, %v1010
    %v1335 = vpack.c.b16 %v1015, %v1011
    %v1336 = vpack.c.b16 %v1016, %v1012
    %v1337 = vpack.c.b16 %v1017, %v1013
    %v1338 = vpack.c.b16 %v1022, %v1018
    %v1339 = vpack.c.b16 %v1023, %v1019
    %v1340 = vpack.c.b16 %v1024, %v1020
    %v1341 = vpack.c.b16 %v1025, %v1021
    %v1342 = vpack.c.b16 %v1030, %v1026
    %v1343 = vpack.c.b16 %v1031, %v1027
    %v1344 = vpack.c.b16 %v1032, %v1028
    %v1345 = vpack.c.b16 %v1033, %v1029
    %v1346 = vpack.c.b16 %v1038, %v1034
    %v1347 = vpack.c.b16 %v1039, %v1035
    %v1348 = vpack.c.b16 %v1040, %v1036
    %v1349 = vpack.c.b16 %v1041, %v1037
    %v1350 = vpack.c.b16 %v1046, %v1042
    %v1351 = vpack.c.b16 %v1047, %v1043
    %v1352 = vpack.c.b16 %v1048, %v1044
    %v1353 = vpack.c.b16 %v1049, %v1045
    %v1354 = vpack.c.b16 %v1054, %v1050
    %v1355 = vpack.c.b16 %v1055, %v1051
    %v1356 = vpack.c.b16 %v1056, %v1052
    %v1357 = vpack.c.b16 %v1057, %v1053
    %v1358 = vpack.c.b16 %v1062, %v1058
    %v1359 = vpack.c.b16 %v1063, %v1059
    %v1360 = vpack.c.b16 %v1064, %v1060
    %v1361 = vpack.c.b16 %v1065, %v1061
    %v1362 = vpack.c.b16 %v1070, %v1066
    %v1363 = vpack.c.b16 %v1071, %v1067
    %v1364 = vpack.c.b16 %v1072, %v1068
    %v1365 = vpack.c.b16 %v1073, %v1069
    %v1366 = vpack.c.b16 %v1078, %v1074
    %v1367 = vpack.c.b16 %v1079, %v1075
    %v1368 = vpack.c.b16 %v1080, %v1076
    %v1369 = vpack.c.b16 %v1081, %v1077
    %v1370 = vpack.c.b16 %v1086, %v1082
    %v1371 = vpack.c.b16 %v1087, %v1083
    %v1372 = vpack.c.b16 %v1088, %v1084
    %v1373 = vpack.c.b16 %v1089, %v1085
    %v1374 = vpack.c.b16 %v1094, %v1090
    %v1375 = vpack.c.b16 %v1095, %v1091
    %v1376 = vpack.c.b16 %v1096, %v1092
    %v1377 = vpack.c.b16 %v1097, %v1093
    %v1378 = vpack.c.b16 %v1102, %v1098
    %v1379 = vpack.c.b16 %v1103, %v1099
    %v1380 = vpack.c.b16 %v1104, %v1100
    %v1381 = vpack.c.b16 %v1105, %v1101
    %v1382 = vpack.c.b16 %v1110, %v1106
    %v1383 = vpack.c.b16 %v1111, %v1107
    %v1384 = vpack.c.b16 %v1112, %v1108
    %v1385 = vpack.c.b16 %v1113, %v1109
    %v1386 = vpack.c.b16 %v1118, %v1114
    %v1387 = vpack.c.b16 %v1119, %v1115
    %v1388 = vpack.c.b16 %v1120, %v1116
    %v1389 = vpack.c.b16 %v1121, %v1117
    %v1390 = vpack.c.b16 %v1126, %v1122
    %v1391 = vpack.c.b16 %v1127, %v1123
    %v1392 = vpack.c.b16 %v1128, %v1124
    %v1393 = vpack.c.b16 %v1129, %v1125
    %v1394 = vpack.c.b16 %v1134, %v1130
    %v1395 = vpack.c.b16 %v1135, %v1131
    %v1396 = vpack.c.b16 %v1136, %v1132
    %v1397 = vpack.c.b16 %v1137, %v1133
    %v1398 = vpack.c.b16 %v1142, %v1138
    %v1399 = vpack.c.b16 %v1143, %v1139
    %v1400 = vpack.c.b16 %v1144, %v1140
    %v1401 = vpack.c.b16 %v1145, %v1141
    %1658 = vmatprep.subr.bf16.mxu0 %v1147
    %1659 = vmatpush1.bf16.msra.mxu0 %v1146
    %1660 = vmatprep.subr.bf16.mxu0 %v1151
    %1661 = vmatpush1.bf16.msra.mxu0 %v1150
    %1662 = vmatprep.subr.bf16.mxu0 %v1155
    %1663 = vmatpush1.bf16.msra.mxu0 %v1154
    %1664 = vmatprep.subr.bf16.mxu0 %v1159
    %1665 = vmatpush1.bf16.msra.mxu0 %v1158
    %1666 = vmatprep.subr.bf16.mxu0 %v1163
    %1667 = vmatpush1.bf16.msra.mxu0 %v1162
    %1668 = vmatprep.subr.bf16.mxu0 %v1167
    %1669 = vmatpush1.bf16.msra.mxu0 %v1166
    %1670 = vmatprep.subr.bf16.mxu0 %v1171
    %1671 = vmatpush1.bf16.msra.mxu0 %v1170
    %1672 = vmatprep.subr.bf16.mxu0 %v1175
    %1673 = vmatpush1.bf16.msra.mxu0 %v1174
    %1674 = vmatprep.subr.bf16.mxu0 %v1179
    %1675 = vmatpush1.bf16.msra.mxu0 %v1178
    %1676 = vmatprep.subr.bf16.mxu0 %v1183
    %1677 = vmatpush1.bf16.msra.mxu0 %v1182
    %1678 = vmatprep.subr.bf16.mxu0 %v1187
    %1679 = vmatpush1.bf16.msra.mxu0 %v1186
    %1680 = vmatprep.subr.bf16.mxu0 %v1191
    %1681 = vmatpush1.bf16.msra.mxu0 %v1190
    %1682 = vmatprep.subr.bf16.mxu0 %v1195
    %1683 = vmatpush1.bf16.msra.mxu0 %v1194
    %1684 = vmatprep.subr.bf16.mxu0 %v1199
    %1685 = vmatpush1.bf16.msra.mxu0 %v1198
    %1686 = vmatprep.subr.bf16.mxu0 %v1203
    %1687 = vmatpush1.bf16.msra.mxu0 %v1202
    %1688 = vmatprep.subr.bf16.mxu0 %v1207
    %1689 = vmatpush1.bf16.msra.mxu0 %v1206
    %1690 = vmatprep.mubr.bf16.mxu0 %v363
    %1691 = vmatmul.mubr.bf16.gmra.mrb[0].mxu0 %v362
    %v1692 = vpop.f32.mrb[0].mxu0
    %v1693 = vadd.f32 %v333, %v1692
    %v1694 = vpop.f32.mrb[0].mxu0
    %v1695 = vadd.f32 %v337, %v1694
    %v1696 = vpop.f32.mrb[0].mxu0
    %v1697 = vpop.f32.mrb[0].mxu0
    %1698 = vdwg.mxu0
    %1699 = vmatprep.subr.bf16.mxu0 %v1211
    %1700 = vmatpush1.bf16.msra.mxu0 %v1210
    %1701 = vmatprep.subr.bf16.mxu0 %v1215
    %1702 = vmatpush1.bf16.msra.mxu0 %v1214
    %1703 = vmatprep.subr.bf16.mxu0 %v1219
    %1704 = vmatpush1.bf16.msra.mxu0 %v1218
    %1705 = vmatprep.subr.bf16.mxu0 %v1223
    %1706 = vmatpush1.bf16.msra.mxu0 %v1222
    %1707 = vmatprep.subr.bf16.mxu0 %v1227
    %1708 = vmatpush1.bf16.msra.mxu0 %v1226
    %1709 = vmatprep.subr.bf16.mxu0 %v1231
    %1710 = vmatpush1.bf16.msra.mxu0 %v1230
    %1711 = vmatprep.subr.bf16.mxu0 %v1235
    %1712 = vmatpush1.bf16.msra.mxu0 %v1234
    %1713 = vmatprep.subr.bf16.mxu0 %v1239
    %1714 = vmatpush1.bf16.msra.mxu0 %v1238
    %1715 = vmatprep.subr.bf16.mxu0 %v1243
    %1716 = vmatpush1.bf16.msra.mxu0 %v1242
    %1717 = vmatprep.subr.bf16.mxu0 %v1247
    %1718 = vmatpush1.bf16.msra.mxu0 %v1246
    %1719 = vmatprep.subr.bf16.mxu0 %v1251
    %1720 = vmatpush1.bf16.msra.mxu0 %v1250
    %1721 = vmatprep.subr.bf16.mxu0 %v1255
    %1722 = vmatpush1.bf16.msra.mxu0 %v1254
    %1723 = vmatprep.subr.bf16.mxu0 %v1259
    %1724 = vmatpush1.bf16.msra.mxu0 %v1258
    %1725 = vmatprep.subr.bf16.mxu0 %v1263
    %1726 = vmatpush1.bf16.msra.mxu0 %v1262
    %1727 = vmatprep.subr.bf16.mxu0 %v1267
    %1728 = vmatpush1.bf16.msra.mxu0 %v1266
    %1729 = vmatprep.subr.bf16.mxu0 %v1271
    %1730 = vmatpush1.bf16.msra.mxu0 %v1270
    %1731 = vmatprep.mubr.bf16.mxu0 %v365
    %1732 = vmatmul.mubr.bf16.gmra.mrb[0].mxu0 %v364
    %v1733 = vpop.f32.mrb[0].mxu0
    %v1734 = vadd.f32 %v1693, %v1733
    %v1735 = vpop.f32.mrb[0].mxu0
    %v1736 = vadd.f32 %v1695, %v1735
    %v1737 = vpop.f32.mrb[0].mxu0
    %v1738 = vpop.f32.mrb[0].mxu0
    %1739 = vdwg.mxu0
    %1740 = vmatprep.subr.bf16.mxu0 %v1275
    %1741 = vmatpush1.bf16.msra.mxu0 %v1274
    %1742 = vmatprep.subr.bf16.mxu0 %v1279
    %1743 = vmatpush1.bf16.msra.mxu0 %v1278
    %1744 = vmatprep.subr.bf16.mxu0 %v1283
    %1745 = vmatpush1.bf16.msra.mxu0 %v1282
    %1746 = vmatprep.subr.bf16.mxu0 %v1287
    %1747 = vmatpush1.bf16.msra.mxu0 %v1286
    %1748 = vmatprep.subr.bf16.mxu0 %v1291
    %1749 = vmatpush1.bf16.msra.mxu0 %v1290
    %1750 = vmatprep.subr.bf16.mxu0 %v1295
    %1751 = vmatpush1.bf16.msra.mxu0 %v1294
    %1752 = vmatprep.subr.bf16.mxu0 %v1299
    %1753 = vmatpush1.bf16.msra.mxu0 %v1298
    %1754 = vmatprep.subr.bf16.mxu0 %v1303
    %1755 = vmatpush1.bf16.msra.mxu0 %v1302
    %1756 = vmatprep.subr.bf16.mxu0 %v1307
    %1757 = vmatpush1.bf16.msra.mxu0 %v1306
    %1758 = vmatprep.subr.bf16.mxu0 %v1311
    %1759 = vmatpush1.bf16.msra.mxu0 %v1310
    %1760 = vmatprep.subr.bf16.mxu0 %v1315
    %1761 = vmatpush1.bf16.msra.mxu0 %v1314
    %1762 = vmatprep.subr.bf16.mxu0 %v1319
    %1763 = vmatpush1.bf16.msra.mxu0 %v1318
    %1764 = vmatprep.subr.bf16.mxu0 %v1323
    %1765 = vmatpush1.bf16.msra.mxu0 %v1322
    %1766 = vmatprep.subr.bf16.mxu0 %v1327
    %1767 = vmatpush1.bf16.msra.mxu0 %v1326
    %1768 = vmatprep.subr.bf16.mxu0 %v1331
    %1769 = vmatpush1.bf16.msra.mxu0 %v1330
    %1770 = vmatprep.subr.bf16.mxu0 %v1335
    %1771 = vmatpush1.bf16.msra.mxu0 %v1334
    %1772 = vmatprep.mubr.bf16.mxu0 %v367
    %1773 = vmatmul.mubr.bf16.gmra.mrb[0].mxu0 %v366
    %v1774 = vpop.f32.mrb[0].mxu0
    %v1775 = vadd.f32 %v1734, %v1774
    %v1776 = vpop.f32.mrb[0].mxu0
    %v1777 = vadd.f32 %v1736, %v1776
    %v1778 = vpop.f32.mrb[0].mxu0
    %v1779 = vpop.f32.mrb[0].mxu0
    %1780 = vdwg.mxu0
    %1781 = vmatprep.subr.bf16.mxu0 %v1339
    %1782 = vmatpush1.bf16.msra.mxu0 %v1338
    %1783 = vmatprep.subr.bf16.mxu0 %v1343
    %1784 = vmatpush1.bf16.msra.mxu0 %v1342
    %1785 = vmatprep.subr.bf16.mxu0 %v1347
    %1786 = vmatpush1.bf16.msra.mxu0 %v1346
    %1787 = vmatprep.subr.bf16.mxu0 %v1351
    %1788 = vmatpush1.bf16.msra.mxu0 %v1350
    %1789 = vmatprep.subr.bf16.mxu0 %v1355
    %1790 = vmatpush1.bf16.msra.mxu0 %v1354
    %1791 = vmatprep.subr.bf16.mxu0 %v1359
    %1792 = vmatpush1.bf16.msra.mxu0 %v1358
    %1793 = vmatprep.subr.bf16.mxu0 %v1363
    %1794 = vmatpush1.bf16.msra.mxu0 %v1362
    %1795 = vmatprep.subr.bf16.mxu0 %v1367
    %1796 = vmatpush1.bf16.msra.mxu0 %v1366
    %1797 = vmatprep.subr.bf16.mxu0 %v1371
    %1798 = vmatpush1.bf16.msra.mxu0 %v1370
    %1799 = vmatprep.subr.bf16.mxu0 %v1375
    %1800 = vmatpush1.bf16.msra.mxu0 %v1374
    %1801 = vmatprep.subr.bf16.mxu0 %v1379
    %1802 = vmatpush1.bf16.msra.mxu0 %v1378
    %1803 = vmatprep.subr.bf16.mxu0 %v1383
    %1804 = vmatpush1.bf16.msra.mxu0 %v1382
    %1805 = vmatprep.subr.bf16.mxu0 %v1387
    %1806 = vmatpush1.bf16.msra.mxu0 %v1386
    %1807 = vmatprep.subr.bf16.mxu0 %v1391
    %1808 = vmatpush1.bf16.msra.mxu0 %v1390
    %1809 = vmatprep.subr.bf16.mxu0 %v1395
    %1810 = vmatpush1.bf16.msra.mxu0 %v1394
    %1811 = vmatprep.subr.bf16.mxu0 %v1399
    %1812 = vmatpush1.bf16.msra.mxu0 %v1398
    %1813 = vmatprep.mubr.bf16.mxu0 %v369
    %1814 = vmatmul.mubr.bf16.gmra.mrb[0].mxu0 %v368
    %v1815 = vpop.f32.mrb[0].mxu0
    %v1816 = vadd.f32 %v1775, %v1815
    %v1817 = vpop.f32.mrb[0].mxu0
    %v1818 = vadd.f32 %v1777, %v1817
    %v1819 = vpop.f32.mrb[0].mxu0
    %v1820 = vpop.f32.mrb[0].mxu0
    %1821 = vdwg.mxu0
    %1822 = vmatprep.subr.bf16.mxu0 %v1149
    %1823 = vmatpush1.bf16.msra.mxu0 %v1148
    %1824 = vmatprep.subr.bf16.mxu0 %v1153
    %1825 = vmatpush1.bf16.msra.mxu0 %v1152
    %1826 = vmatprep.subr.bf16.mxu0 %v1157
    %1827 = vmatpush1.bf16.msra.mxu0 %v1156
    %1828 = vmatprep.subr.bf16.mxu0 %v1161
    %1829 = vmatpush1.bf16.msra.mxu0 %v1160
    %1830 = vmatprep.subr.bf16.mxu0 %v1165
    %1831 = vmatpush1.bf16.msra.mxu0 %v1164
    %1832 = vmatprep.subr.bf16.mxu0 %v1169
    %1833 = vmatpush1.bf16.msra.mxu0 %v1168
    %1834 = vmatprep.subr.bf16.mxu0 %v1173
    %1835 = vmatpush1.bf16.msra.mxu0 %v1172
    %1836 = vmatprep.subr.bf16.mxu0 %v1177
    %1837 = vmatpush1.bf16.msra.mxu0 %v1176
    %1838 = vmatprep.subr.bf16.mxu0 %v1181
    %1839 = vmatpush1.bf16.msra.mxu0 %v1180
    %1840 = vmatprep.subr.bf16.mxu0 %v1185
    %1841 = vmatpush1.bf16.msra.mxu0 %v1184
    %1842 = vmatprep.subr.bf16.mxu0 %v1189
    %1843 = vmatpush1.bf16.msra.mxu0 %v1188
    %1844 = vmatprep.subr.bf16.mxu0 %v1193
    %1845 = vmatpush1.bf16.msra.mxu0 %v1192
    %1846 = vmatprep.subr.bf16.mxu0 %v1197
    %1847 = vmatpush1.bf16.msra.mxu0 %v1196
    %1848 = vmatprep.subr.bf16.mxu0 %v1201
    %1849 = vmatpush1.bf16.msra.mxu0 %v1200
    %1850 = vmatprep.subr.bf16.mxu0 %v1205
    %1851 = vmatpush1.bf16.msra.mxu0 %v1204
    %1852 = vmatprep.subr.bf16.mxu0 %v1209
    %1853 = vmatpush1.bf16.msra.mxu0 %v1208
    %1854 = vmatprep.mubr.bf16.mxu0 %v363
    %1855 = vmatmul.mubr.bf16.gmra.mrb[0].mxu0 %v362
    %v1856 = vpop.f32.mrb[0].mxu0
    %v1857 = vadd.f32 %v341, %v1856
    %v1858 = vpop.f32.mrb[0].mxu0
    %v1859 = vadd.f32 %v345, %v1858
    %v1860 = vpop.f32.mrb[0].mxu0
    %v1861 = vpop.f32.mrb[0].mxu0
    %1862 = vdwg.mxu0
    %1863 = vmatprep.subr.bf16.mxu0 %v1213
    %1864 = vmatpush1.bf16.msra.mxu0 %v1212
    %1865 = vmatprep.subr.bf16.mxu0 %v1217
    %1866 = vmatpush1.bf16.msra.mxu0 %v1216
    %1867 = vmatprep.subr.bf16.mxu0 %v1221
    %1868 = vmatpush1.bf16.msra.mxu0 %v1220
    %1869 = vmatprep.subr.bf16.mxu0 %v1225
    %1870 = vmatpush1.bf16.msra.mxu0 %v1224
    %1871 = vmatprep.subr.bf16.mxu0 %v1229
    %1872 = vmatpush1.bf16.msra.mxu0 %v1228
    %1873 = vmatprep.subr.bf16.mxu0 %v1233
    %1874 = vmatpush1.bf16.msra.mxu0 %v1232
    %1875 = vmatprep.subr.bf16.mxu0 %v1237
    %1876 = vmatpush1.bf16.msra.mxu0 %v1236
    %1877 = vmatprep.subr.bf16.mxu0 %v1241
    %1878 = vmatpush1.bf16.msra.mxu0 %v1240
    %1879 = vmatprep.subr.bf16.mxu0 %v1245
    %1880 = vmatpush1.bf16.msra.mxu0 %v1244
    %1881 = vmatprep.subr.bf16.mxu0 %v1249
    %1882 = vmatpush1.bf16.msra.mxu0 %v1248
    %1883 = vmatprep.subr.bf16.mxu0 %v1253
    %1884 = vmatpush1.bf16.msra.mxu0 %v1252
    %1885 = vmatprep.subr.bf16.mxu0 %v1257
    %1886 = vmatpush1.bf16.msra.mxu0 %v1256
    %1887 = vmatprep.subr.bf16.mxu0 %v1261
    %1888 = vmatpush1.bf16.msra.mxu0 %v1260
    %1889 = vmatprep.subr.bf16.mxu0 %v1265
    %1890 = vmatpush1.bf16.msra.mxu0 %v1264
    %1891 = vmatprep.subr.bf16.mxu0 %v1269
    %1892 = vmatpush1.bf16.msra.mxu0 %v1268
    %1893 = vmatprep.subr.bf16.mxu0 %v1273
    %1894 = vmatpush1.bf16.msra.mxu0 %v1272
    %1895 = vmatprep.mubr.bf16.mxu0 %v365
    %1896 = vmatmul.mubr.bf16.gmra.mrb[0].mxu0 %v364
    %v1897 = vpop.f32.mrb[0].mxu0
    %v1898 = vadd.f32 %v1857, %v1897
    %v1899 = vpop.f32.mrb[0].mxu0
    %v1900 = vadd.f32 %v1859, %v1899
    %v1901 = vpop.f32.mrb[0].mxu0
    %v1902 = vpop.f32.mrb[0].mxu0
    %1903 = vdwg.mxu0
    %1904 = vmatprep.subr.bf16.mxu0 %v1277
    %1905 = vmatpush1.bf16.msra.mxu0 %v1276
    %1906 = vmatprep.subr.bf16.mxu0 %v1281
    %1907 = vmatpush1.bf16.msra.mxu0 %v1280
    %1908 = vmatprep.subr.bf16.mxu0 %v1285
    %1909 = vmatpush1.bf16.msra.mxu0 %v1284
    %1910 = vmatprep.subr.bf16.mxu0 %v1289
    %1911 = vmatpush1.bf16.msra.mxu0 %v1288
    %1912 = vmatprep.subr.bf16.mxu0 %v1293
    %1913 = vmatpush1.bf16.msra.mxu0 %v1292
    %1914 = vmatprep.subr.bf16.mxu0 %v1297
    %1915 = vmatpush1.bf16.msra.mxu0 %v1296
    %1916 = vmatprep.subr.bf16.mxu0 %v1301
    %1917 = vmatpush1.bf16.msra.mxu0 %v1300
    %1918 = vmatprep.subr.bf16.mxu0 %v1305
    %1919 = vmatpush1.bf16.msra.mxu0 %v1304
    %1920 = vmatprep.subr.bf16.mxu0 %v1309
    %1921 = vmatpush1.bf16.msra.mxu0 %v1308
    %1922 = vmatprep.subr.bf16.mxu0 %v1313
    %1923 = vmatpush1.bf16.msra.mxu0 %v1312
    %1924 = vmatprep.subr.bf16.mxu0 %v1317
    %1925 = vmatpush1.bf16.msra.mxu0 %v1316
    %1926 = vmatprep.subr.bf16.mxu0 %v1321
    %1927 = vmatpush1.bf16.msra.mxu0 %v1320
    %1928 = vmatprep.subr.bf16.mxu0 %v1325
    %1929 = vmatpush1.bf16.msra.mxu0 %v1324
    %1930 = vmatprep.subr.bf16.mxu0 %v1329
    %1931 = vmatpush1.bf16.msra.mxu0 %v1328
    %1932 = vmatprep.subr.bf16.mxu0 %v1333
    %1933 = vmatpush1.bf16.msra.mxu0 %v1332
    %1934 = vmatprep.subr.bf16.mxu0 %v1337
    %1935 = vmatpush1.bf16.msra.mxu0 %v1336
    %1936 = vmatprep.mubr.bf16.mxu0 %v367
    %1937 = vmatmul.mubr.bf16.gmra.mrb[0].mxu0 %v366
    %v1938 = vpop.f32.mrb[0].mxu0
    %v1939 = vadd.f32 %v1898, %v1938
    %v1940 = vpop.f32.mrb[0].mxu0
    %v1941 = vadd.f32 %v1900, %v1940
    %v1942 = vpop.f32.mrb[0].mxu0
    %v1943 = vpop.f32.mrb[0].mxu0
    %1944 = vdwg.mxu0
    %1945 = vmatprep.subr.bf16.mxu0 %v1341
    %1946 = vmatpush1.bf16.msra.mxu0 %v1340
    %1947 = vmatprep.subr.bf16.mxu0 %v1345
    %1948 = vmatpush1.bf16.msra.mxu0 %v1344
    %1949 = vmatprep.subr.bf16.mxu0 %v1349
    %1950 = vmatpush1.bf16.msra.mxu0 %v1348
    %1951 = vmatprep.subr.bf16.mxu0 %v1353
    %1952 = vmatpush1.bf16.msra.mxu0 %v1352
    %1953 = vmatprep.subr.bf16.mxu0 %v1357
    %1954 = vmatpush1.bf16.msra.mxu0 %v1356
    %1955 = vmatprep.subr.bf16.mxu0 %v1361
    %1956 = vmatpush1.bf16.msra.mxu0 %v1360
    %1957 = vmatprep.subr.bf16.mxu0 %v1365
    %1958 = vmatpush1.bf16.msra.mxu0 %v1364
    %1959 = vmatprep.subr.bf16.mxu0 %v1369
    %1960 = vmatpush1.bf16.msra.mxu0 %v1368
    %1961 = vmatprep.subr.bf16.mxu0 %v1373
    %1962 = vmatpush1.bf16.msra.mxu0 %v1372
    %1963 = vmatprep.subr.bf16.mxu0 %v1377
    %1964 = vmatpush1.bf16.msra.mxu0 %v1376
    %1965 = vmatprep.subr.bf16.mxu0 %v1381
    %1966 = vmatpush1.bf16.msra.mxu0 %v1380
    %1967 = vmatprep.subr.bf16.mxu0 %v1385
    %1968 = vmatpush1.bf16.msra.mxu0 %v1384
    %1969 = vmatprep.subr.bf16.mxu0 %v1389
    %1970 = vmatpush1.bf16.msra.mxu0 %v1388
    %1971 = vmatprep.subr.bf16.mxu0 %v1393
    %1972 = vmatpush1.bf16.msra.mxu0 %v1392
    %1973 = vmatprep.subr.bf16.mxu0 %v1397
    %1974 = vmatpush1.bf16.msra.mxu0 %v1396
    %1975 = vmatprep.subr.bf16.mxu0 %v1401
    %1976 = vmatpush1.bf16.msra.mxu0 %v1400
    %1977 = vmatprep.mubr.bf16.mxu0 %v369
    %1978 = vmatmul.mubr.bf16.gmra.mrb[0].mxu0 %v368
    %v1979 = vpop.f32.mrb[0].mxu0
    %v1980 = vadd.f32 %v1939, %v1979
    %v1981 = vpop.f32.mrb[0].mxu0
    %v1982 = vadd.f32 %v1941, %v1981
    %v1983 = vpop.f32.mrb[0].mxu0
    %v1984 = vpop.f32.mrb[0].mxu0
    %1985 = vdwg.mxu0
    %v1986 = vtanh.pop %v1816
    %v1987 = vtanh.pop %v1818
    %v1988 = vtanh.pop %v1980
    %v1989 = vtanh.pop %v1982
    %v1990 = vld [vmem:[%s4] sm:$0xff]
    %v1991 = vld [vmem:[%s5] sm:$0x1]
    %v1992 = vlaneseq
    %v1993 = vand.u32 %v1992, 127
    %v1995 = vrot.slane %v1990, 7
    %v1997 = vsub.f32 %v1990, %v1995
    %1999 = vrot.lane.b32.xlu0 %v1991, 1
    %v2000 = vpop.permute.xlu0 %1999
    %v2002 = vsub.f32 %v1991, %v2000
    %v2004 = vlaneseq
    %v2005 = vshrl.u32 %v2004, 7
    %v2006 = vsub.s32 1, %v2005
    %v2007 = vrot.slane %v1997, %v2006
    %v2008 = vlaneseq
    %v2009 = vshrl.u32 %v2008, 7
    %v2010 = vsub.s32 3, %v2009
    %v2011 = vrot.slane %v1997, %v2010
    %v2012 = vlaneseq
    %v2013 = vshrl.u32 %v2012, 7
    %v2014 = vsub.s32 5, %v2013
    %v2015 = vrot.slane %v1997, %v2014
    %v2016 = vlaneseq
    %v2017 = vshrl.u32 %v2016, 7
    %v2018 = vsub.s32 7, %v2017
    %v2019 = vrot.slane %v1997, %v2018
    %v2024 = vlaneseq
    %v2025 = vshrl.u32 %v2024, 7
    %v2026 = vsub.s32 1, %v2025
    %v2027 = vrot.slane %v2007, %v2026
    %v2028 = vlaneseq
    %v2029 = vshrl.u32 %v2028, 7
    %v2030 = vsub.s32 1, %v2029
    %v2031 = vrot.slane %v2011, %v2030
    %v2032 = vlaneseq
    %v2033 = vshrl.u32 %v2032, 7
    %v2034 = vsub.s32 1, %v2033
    %v2035 = vrot.slane %v2015, %v2034
    %v2036 = vlaneseq
    %v2037 = vshrl.u32 %v2036, 7
    %v2038 = vsub.s32 1, %v2037
    %v2039 = vrot.slane %v2019, %v2038
    %v2040 = vmul.f32 %v1986, %v2027
    %v2041 = vmul.f32 %v1987, %v2031
    %v2042 = vmul.f32 %v1988, %v2035
    %v2043 = vmul.f32 %v1989, %v2039
    %v2044 = vadd.f32 %v2040, %v2041
    %v2045 = vadd.f32 %v2044, %v2042
    %v2046 = vadd.f32 %v2045, %v2043
    %2047 = vadd.xlane.f32.xlu0 %v2046
    %v2048 = vpop.xlane.xlu0 %2047
    %v2050 = vlaneseq
    %v2051 = vshrl.u32 %v2050, 7
    %v2052 = vsub.s32 0, %v2051
    %v2053 = vrot.slane %v2002, %v2052
    %v2055 = vadd.f32 %v2048, %v2053
    %v2056 = vmax.f32 %v2055, 0.0
    %v2057 = vand.u32 2147483647, %v2055
    %v2058 = vsub.f32 0.0, %v2057
    %v2059 = vmul.f32 %v2058, 1.442695
    %v2060 = vpow.pop %v2059
    %v2061 = vadd.f32 %v2060, 1.0
    %v2062 = vlog2.pop %v2061
    %v2063 = vmul.f32 %v2062, 0.6931472
    %v2064 = vadd.f32 %v2056, %v2063
    %vm2065 = vcmp.eq.s32.totalorder %v1993, 0
    %v2066 = vsub.f32 0.0, %v2064
    %v2067 = vsub.f32 %v2055, %v2064
    %2069 = vset.pattern.permute.xlu0 1
    %2070 = vperm.xlu0 %2069, %v2066
    %v2071 = vpop.permute.xlu0 %2070
    %2074 = vset.pattern.permute.xlu0 1
    %2075 = vperm.xlu0 %2074, %v2067
    %v2076 = vpop.permute.xlu0 %2075
    %v2078 = vsel %vm2065, %v2071, %v2076
    %vm2079 = vcmask 15360
    %2080 = vst.msk [vmem:[%s6] sm:$0xff] %vm2079, %v2078
    // Predicated region
    $region38: #{tpu_custom_call.1} parent=1 // pred_check
      _
    $region39: #{tpu_custom_call.1} parent=1 // pred_check_branch
      %2082 = sbr.rel (0) target = $region41
    $region40: #{tpu_custom_call.1} parent=1 // pred_region
      _
    $region41: #{tpu_custom_call.1} parent=1 // pred_fallthru
      _
    // Predicated region
    $region42: #{tpu_custom_call.1} parent=1 // pred_check
      _
    $region43: #{tpu_custom_call.1} parent=1 // pred_check_branch
      %2084 = sbr.rel (0) target = $region45
    $region44: #{tpu_custom_call.1} parent=1 // pred_region
      _
    $region45: #{tpu_custom_call.1} parent=1 // pred_fallthru
      _
    %2085 = vsyncpa [#allocation3], 1
    %2086 = vsyncpa [#allocation5], 1

</llo_original>
